<compile_context>
chip_gen: v7x
topology: tpu7x:2x2x1
jax: 0.10.0
libtpu: 0.0.40
codegen_flags: <defaults>
</compile_context>

<pallas_src>
import functools
import math

import jax
import jax.numpy as jnp
import numpy as np
from jax import lax
from jax.experimental import pallas as pl
from jax.experimental.pallas import tpu as pltpu

_HIGHEST = lax.Precision.HIGHEST
_HIGH = lax.Precision.HIGH


def _round_up(v, m):
    return (v + m - 1) // m * m


def _gram_precision():
    """Streamed-Gram MXU precision.

    HIGHEST (~6 bf16 passes) keeps the Gram mem-bound on v6e/v7x, but on v5e
    (197 TF/s MXU vs ~0.8 TB/s HBM) it flips phase 1 to MXU-bound; HIGH
    (3 passes) keeps v5e tracking the HBM stream with negligible error."""
    try:
        kind = jax.devices()[0].device_kind.lower()
    except Exception:
        return _HIGHEST
    if "v5 lite" in kind or "v5lite" in kind or "v5e" in kind:
        return _HIGH
    return _HIGHEST


def _vmem_capacity_bytes():
    try:
        info = pltpu.get_tpu_info()
        cap = getattr(info, "vmem_capacity_bytes", None)
        if cap:
            return int(cap)
    except Exception:
        pass
    return 64 * 1024 * 1024  # conservative: v7x per-TensorCore VMEM


def _accum_kernel(n_rows, tn, tiles_per_split, gram_prec, needs_mask,
                  x_ref, sum_ref, xtx_ref):
    """Phase 1a: per-split streamed accumulation of sum(x) and X^T X."""
    c = pl.program_id(0)
    k = pl.program_id(1)

    @pl.when(k == 0)
    def _():
        sum_ref[...] = jnp.zeros(sum_ref.shape, sum_ref.dtype)
        xtx_ref[...] = jnp.zeros(xtx_ref.shape, xtx_ref.dtype)

    x = x_ref[...].astype(jnp.float32)                        # [TN, B]
    if needs_mask:
        # Global (unclamped) tile index -> number of valid rows in this tile.
        # Zeroing the ragged tail (and fully-overhanging tiles) makes the
        # padded rows contribute nothing to either accumulator.
        g = c * tiles_per_split + k
        valid = n_rows - g * tn
        row = lax.broadcasted_iota(jnp.int32, x.shape, 0)
        x = jnp.where(row < valid, x, 0.0)

    sum_ref[...] += jnp.sum(x, axis=0, keepdims=True)[None]   # [1, 1, B]
    xtx_ref[...] += lax.dot_general(
        x, x, (((0,), (0,)), ((), ())),
        preferred_element_type=jnp.float32, precision=gram_prec)[None]


def _finalize_kernel(eps, n_iter, n_rows,
                     sum_ref, xtx_ref, w_ref, b_ref,
                     wdec_ref, bdec_ref, mean_ref, deconv_ref):
    """Phase 1b: combine partials, Newton-Schulz isqrt, decorrelated (w, b)."""
    blk = deconv_ref.shape[0]
    inv_n = 1.0 / n_rows

    mean = jnp.sum(sum_ref[...], axis=0) * inv_n              # [1, B]
    xtx = jnp.sum(xtx_ref[...], axis=0)                       # [B, B]

    row = lax.broadcasted_iota(jnp.int32, (blk, blk), 0)
    col = lax.broadcasted_iota(jnp.int32, (blk, blk), 1)
    eye = (row == col).astype(jnp.float32)

    # Cov = eps*I + (1/N) Xc^T Xc = eps*I + (1/N) X^T X - mean mean^T
    # NOTE: raw-moment form (single pass over X); for activations with very
    # large mean/std ratios the centered two-pass form is more robust.
    mean_rows = jnp.broadcast_to(mean, (blk, blk))            # [i,j] = mean[j]
    mean_cols = mean_rows.T                                    # [i,j] = mean[i]
    cov = eps * eye + inv_n * xtx - mean_cols * mean_rows

    # Newton-Schulz inverse square root (f32, HIGHEST precision, unrolled).
    sq = jnp.sum(cov * cov)
    inv_norm = lax.rsqrt(sq)                                  # 1/||Cov||_F
    y0 = cov * inv_norm
    z0 = eye

    def ns_body(_, carry):
        y, z = carry
        t = 0.5 * (3.0 * eye - jnp.dot(
            z, y, preferred_element_type=jnp.float32, precision=_HIGHEST))
        y = jnp.dot(y, t, preferred_element_type=jnp.float32, precision=_HIGHEST)
        z = jnp.dot(t, z, preferred_element_type=jnp.float32, precision=_HIGHEST)
        return y, z

    y, z = lax.fori_loop(0, n_iter, ns_body, (y0, z0), unroll=True)
    deconv = z * jnp.sqrt(inv_norm)                           # Z / sqrt(||Cov||_F)

    # Decorrelated weight / bias.
    w = jnp.dot(w_ref[...].astype(jnp.float32), deconv,
                preferred_element_type=jnp.float32, precision=_HIGHEST)  # [O,B]
    wm = lax.dot_general(mean, w, (((1,), (1,)), ((), ())),
                         preferred_element_type=jnp.float32,
                         precision=_HIGHEST)                  # [1, O]
    b = b_ref[...].astype(jnp.float32) - wm                   # [1, O]

    wdec_ref[...] = w.astype(wdec_ref.dtype)                  # f32 (cheap; O*B)
    bdec_ref[...] = b
    mean_ref[...] = mean
    deconv_ref[...] = deconv


def _linear_kernel(x_ref, w_ref, b_ref, out_ref):
    """Phase 2: out = X @ w^T + b as a bf16 MXU GEMM with f32 accumulation."""
    x = x_ref[...].astype(jnp.bfloat16)                       # [TN, B]
    w = w_ref[...].astype(jnp.bfloat16)                       # [O, B]
    acc = lax.dot_general(x, w, (((1,), (1,)), ((), ())),
                          preferred_element_type=jnp.float32)  # [TN, O]
    out_ref[...] = (acc + b_ref[...]).astype(out_ref.dtype)


def delinear_forward(x, weight, bias, running_mean, running_deconv,
                     eps=1e-5, n_iter=5, momentum=0.1, n_tile=2048):
    """Training-mode Delinear forward.

    Returns (out, new_running_mean, new_running_deconv).
    x may be bf16 or f32 (kept as-is at the kernel boundary; stats math is
    done in f32 in-register, GEMM in bf16 with f32 accumulation)."""
    out_features, in_features = weight.shape
    blk = in_features
    # TODO(synk): the grouped block < in_features view path of Delinear is not
    # implemented here (block == in_features assumed, as in the default config).
    # TODO(synk): eval-mode (running-stats) branch not implemented; this is the
    # training-mode forward only.
    # NOTE: in_features that is not a multiple of 128 (or out-of-8-sublane
    # B x B shapes) still compiles (block == full array dim) but runs with
    # masked/padded layouts in the Gram / Newton-Schulz / stores.
    assert blk == in_features

    out_dtype = x.dtype
    x2d = x.reshape(-1, in_features)
    n = x2d.shape[0]

    # Tile selection: big tiles amortize the ~0.35us/step overhead, but keep
    # at least 2 N-tiles when possible so the "parallel" phase-2 axis (and the
    # phase-1 core split) can load-balance across both v7x TensorCores.
    n_tile = max(8, _round_up(n_tile, 8))
    two_way = max(8, _round_up(pl.cdiv(n, 2), 8))
    tn = min(n_tile, two_way)
    n_tiles = pl.cdiv(n, tn)

    # Phase-1 core split (v7x megacore); harmless on single-TC chips.
    n_splits = 2 if n_tiles >= 2 else 1
    tiles_per_split = pl.cdiv(n_tiles, n_splits)
    covered_tiles = n_splits * tiles_per_split
    needs_mask = (n % tn != 0) or (covered_tiles != n_tiles)

    if covered_tiles == n_tiles:
        def x_index_acc(c, k):
            return (c * tiles_per_split + k, 0)
    else:
        last_tile = n_tiles - 1

        def x_index_acc(c, k):
            # Overhang tiles re-read the last valid block (in-bounds DMA);
            # the kernel fully masks them via the unclamped tile index.
            return (jnp.minimum(c * tiles_per_split + k, last_tile), 0)

    w_f32 = weight.astype(jnp.float32)
    if bias is None:
        b_f32 = jnp.zeros((out_features,), jnp.float32)
    else:
        b_f32 = bias.astype(jnp.float32)
    b2d = b_f32.reshape(1, out_features)

    gram_prec = _gram_precision()

    # Per-shape VMEM budget (the working set scales as blk^2 for the Gram /
    # Newton-Schulz finalize) instead of a hard-coded constant, capped under
    # the device's physical VMEM so v7x (64 MiB) doesn't hit a cliff.
    # TODO(synk): block the B x B Gram / Newton-Schulz working set for
    # in_features large enough (~1.5K+) to exceed v7x VMEM.
    x_itemsize = jnp.dtype(x.dtype).itemsize
    o_itemsize = jnp.dtype(out_dtype).itemsize
    est = (3 * tn * blk * max(x_itemsize, 4)          # streamed X tiles
           + 10 * blk * blk * 4                       # Gram partials + NS temps
           + 3 * out_features * blk * 4               # W, w_dec
           + 3 * tn * out_features * max(o_itemsize, 4))
    vmem_limit = int(min(max(2 * est, 16 * 1024 * 1024),
                         int(_vmem_capacity_bytes() * 0.9)))

    # ---- Phase 1a: per-split partial statistics --------------------------
    sum_part, xtx_part = pl.pallas_call(
        functools.partial(_accum_kernel, n, tn, tiles_per_split,
                          gram_prec, needs_mask),
        out_shape=(jax.ShapeDtypeStruct((n_splits, 1, blk), jnp.float32),
                   jax.ShapeDtypeStruct((n_splits, blk, blk), jnp.float32)),
        grid=(n_splits, tiles_per_split),
        in_specs=[pl.BlockSpec((tn, blk), x_index_acc)],
        out_specs=(pl.BlockSpec((1, 1, blk), lambda c, k: (c, 0, 0)),
                   pl.BlockSpec((1, blk, blk), lambda c, k: (c, 0, 0))),
        compiler_params=pltpu.CompilerParams(
            dimension_semantics=("parallel", "arbitrary"),
            vmem_limit_bytes=vmem_limit),
    )(x2d)

    # ---- Phase 1b: finalize (mean, deconv, decorrelated w & b) -----------
    w_dec, b_dec, mean, deconv = pl.pallas_call(
        functools.partial(_finalize_kernel, eps, n_iter, float(n)),
        out_shape=(jax.ShapeDtypeStruct((out_features, blk), jnp.float32),
                   jax.ShapeDtypeStruct((1, out_features), jnp.float32),
                   jax.ShapeDtypeStruct((1, blk), jnp.float32),
                   jax.ShapeDtypeStruct((blk, blk), jnp.float32)),
        grid=(1,),
        in_specs=[pl.BlockSpec((n_splits, 1, blk), lambda i: (0, 0, 0)),
                  pl.BlockSpec((n_splits, blk, blk), lambda i: (0, 0, 0)),
                  pl.BlockSpec((out_features, blk), lambda i: (0, 0)),
                  pl.BlockSpec((1, out_features), lambda i: (0, 0))],
        out_specs=(pl.BlockSpec((out_features, blk), lambda i: (0, 0)),
                   pl.BlockSpec((1, out_features), lambda i: (0, 0)),
                   pl.BlockSpec((1, blk), lambda i: (0, 0)),
                   pl.BlockSpec((blk, blk), lambda i: (0, 0))),
        compiler_params=pltpu.CompilerParams(
            dimension_semantics=("arbitrary",),
            vmem_limit_bytes=vmem_limit),
    )(sum_part, xtx_part, w_f32, b2d)

    # ---- Phase 2: out = X @ w^T + b  (N axis "parallel" -> megacore) -----
    # Output is written at its natural shape: no lane padding, no de-pad
    # slice, no row padding (Pallas drops ragged-tail writes).
    out2d = pl.pallas_call(
        _linear_kernel,
        out_shape=jax.ShapeDtypeStruct((n, out_features), out_dtype),
        grid=(n_tiles,),
        in_specs=[pl.BlockSpec((tn, blk), lambda i: (i, 0)),
                  pl.BlockSpec((out_features, blk), lambda i: (0, 0)),
                  pl.BlockSpec((1, out_features), lambda i: (0, 0))],
        out_specs=pl.BlockSpec((tn, out_features), lambda i: (i, 0)),
        compiler_params=pltpu.CompilerParams(
            dimension_semantics=("parallel",),
            vmem_limit_bytes=vmem_limit),
    )(x2d, w_dec, b_dec)

    out = out2d.reshape(x.shape[:-1] + (out_features,))

    # Functional equivalent of the in-place running-buffer EMA updates.
    new_running_mean = (1.0 - momentum) * running_mean + momentum * mean[0]
    new_running_deconv = (1.0 - momentum) * running_deconv + momentum * deconv
    return out, new_running_mean, new_running_deconv


def _reference_forward(x, weight, bias, eps=1e-5, n_iter=5):
    """Pure-JAX reference mirroring the PyTorch training-mode forward."""
    with jax.default_matmul_precision("highest"):
        in_features = weight.shape[1]
        X = x.reshape(-1, in_features)
        n = X.shape[0]
        mean = X.mean(0)
        Xc = X - mean[None, :]
        eye = jnp.eye(in_features, dtype=jnp.float32)
        cov = eps * eye + (1.0 / n) * (Xc.T @ Xc)
        norm_a = jnp.sqrt(jnp.sum(cov * cov))
        y, z = cov / norm_a, eye
        for _ in range(n_iter):
            t = 0.5 * (3.0 * eye - z @ y)
            y = y @ t
            z = t @ z
        deconv = z / jnp.sqrt(norm_a)
        w = weight @ deconv
        b = bias - w @ mean
        out = (X @ w.T + b[None, :]).reshape(x.shape[:-1] + (weight.shape[0],))
    return out, mean, deconv


if __name__ == "__main__":
    in_features, out_features = 128, 64
    batch_shape = (3, 6)                      # input: [3, 6, 128] -> N = 18 rows

    key = jax.random.PRNGKey(0)
    kx, kw, kb = jax.random.split(key, 3)

    # kaiming_uniform_(a=sqrt(5)) on [out, in]  ->  bound = 1/sqrt(fan_in)
    fan_in = in_features
    w_bound = 1.0 / math.sqrt(fan_in)
    weight = jax.random.uniform(kw, (out_features, in_features),
                                jnp.float32, -w_bound, w_bound)
    bias = jax.random.uniform(kb, (out_features,), jnp.float32, -w_bound, w_bound)
    running_mean = jnp.zeros((in_features,), jnp.float32)
    running_deconv = jnp.eye(in_features, dtype=jnp.float32)
    momentum = 0.1

    x = jax.random.normal(kx, batch_shape + (in_features,), jnp.float32)

    ref_out, ref_mean, ref_deconv = _reference_forward(x, weight, bias)
    exp_rm = (1.0 - momentum) * running_mean + momentum * ref_mean
    exp_rd = (1.0 - momentum) * running_deconv + momentum * ref_deconv

    # n_tile=8 exercises multi-tile accumulation, the ragged (masked) tail and
    # the odd-tile-count core-split overhang; the default n_tile exercises the
    # even two-way split with a ragged last tile.
    for nt in (8, 2048):
        out, new_rm, new_rd = delinear_forward(
            x, weight, bias, running_mean, running_deconv,
            momentum=momentum, n_tile=nt)
        jax.block_until_ready((out, new_rm, new_rd))

        np.testing.assert_allclose(np.asarray(out), np.asarray(ref_out),
                                   rtol=2e-2, atol=2e-2)
        np.testing.assert_allclose(np.asarray(new_rm), np.asarray(exp_rm),
                                   rtol=1e-3, atol=1e-4)
        np.testing.assert_allclose(np.asarray(new_rd), np.asarray(exp_rd),
                                   rtol=1e-2, atol=1e-3)

    print("KERNEL_OK")
</pallas_src>

<mosaic_0001>
module attributes {stable_mosaic.version = 11 : i64} {
  func.func @_accum_kernel(%arg0: i32, %arg1: i32, %arg2: memref<8x128xf32, #tpu.memory_space<vmem>>, %arg3: memref<1x1x128xf32, #tpu.memory_space<vmem>>, %arg4: memref<1x128x128xf32, #tpu.memory_space<vmem>>) attributes {dimension_semantics = [#tpu.dimension_semantics<parallel>, #tpu.dimension_semantics<arbitrary>], iteration_bounds = array<i64: 2, 2>, scalar_prefetch = 0 : i64, scratch_operands = 0 : i64, tpu.core_type = #tpu.core_type<tc>, window_params = [{transform_indices = @transform_0, window_bounds = array<i64: 8, 128>}, {transform_indices = @transform_1, window_bounds = array<i64: 1, 1, 128>}, {transform_indices = @transform_2, window_bounds = array<i64: 1, 128, 128>}]} {
    %c0_i32 = arith.constant 0 : i32
    %0 = arith.cmpi eq, %arg1, %c0_i32 : i32
    %1 = arith.extui %0 : i1 to i32
    %c0_i32_0 = arith.constant 0 : i32
    %2 = arith.cmpi ne, %1, %c0_i32_0 : i32
    scf.if %2 {
      %cst_16 = arith.constant 0.000000e+00 : f32
      %24 = vector.broadcast %cst_16 : f32 to vector<1x1x128xf32>
      %c0_17 = arith.constant 0 : index
      %c0_18 = arith.constant 0 : index
      %c0_19 = arith.constant 0 : index
      %25 = vector.load %arg3[%c0_17, %c0_18, %c0_19] : memref<1x1x128xf32, #tpu.memory_space<vmem>>, vector<1x1x128xf32>
      tpu.vector_store %arg3[%c0_17, %c0_18, %c0_19], %24 {strides = array<i32>} : memref<1x1x128xf32, #tpu.memory_space<vmem>>, vector<1x1x128xf32>,
      %cst_20 = arith.constant 0.000000e+00 : f32
      %26 = vector.broadcast %cst_20 : f32 to vector<1x128x128xf32>
      %c0_21 = arith.constant 0 : index
      %c0_22 = arith.constant 0 : index
      %c0_23 = arith.constant 0 : index
      %27 = vector.load %arg4[%c0_21, %c0_22, %c0_23] : memref<1x128x128xf32, #tpu.memory_space<vmem>>, vector<1x128x128xf32>
      tpu.vector_store %arg4[%c0_21, %c0_22, %c0_23], %26 {strides = array<i32>} : memref<1x128x128xf32, #tpu.memory_space<vmem>>, vector<1x128x128xf32>,
    } else {
    }
    %c0 = arith.constant 0 : index
    %c0_1 = arith.constant 0 : index
    %3 = vector.load %arg2[%c0, %c0_1] : memref<8x128xf32, #tpu.memory_space<vmem>>, vector<8x128xf32>
    %c2_i32 = arith.constant 2 : i32
    %4 = arith.muli %arg0, %c2_i32 : i32
    %5 = arith.addi %4, %arg1 : i32
    %c8_i32 = arith.constant 8 : i32
    %6 = arith.muli %5, %c8_i32 : i32
    %c18_i32 = arith.constant 18 : i32
    %7 = arith.subi %c18_i32, %6 : i32
    %8 = tpu.iota {dimensions = array<i32: 0>} : vector<8x128xi32>
    %9 = vector.broadcast %7 : i32 to vector<8x128xi32>
    %10 = arith.cmpi slt, %8, %9 : vector<8x128xi32>
    %cst = arith.constant 0.000000e+00 : f32
    %11 = vector.broadcast %cst : f32 to vector<8x128xf32>
    %12 = arith.select %10, %3, %11 : vector<8x128xi1>, vector<8x128xf32>
    %c0_2 = arith.constant 0 : index
    %c0_3 = arith.constant 0 : index
    %c0_4 = arith.constant 0 : index
    %13 = vector.load %arg3[%c0_2, %c0_3, %c0_4] : memref<1x1x128xf32, #tpu.memory_space<vmem>>, vector<1x1x128xf32>
    %cst_5 = arith.constant dense<0.000000e+00> : vector<128xf32>
    %14 = vector.multi_reduction <add>, %12, %cst_5 [0] : vector<8x128xf32> to vector<128xf32>
    %15 = vector.shape_cast %14 : vector<128xf32> to vector<1x128xf32>
    %16 = vector.shape_cast %15 : vector<1x128xf32> to vector<1x1x128xf32>
    %17 = arith.addf %13, %16 : vector<1x1x128xf32>
    %c0_6 = arith.constant 0 : index
    %c0_7 = arith.constant 0 : index
    %c0_8 = arith.constant 0 : index
    %18 = vector.load %arg3[%c0_6, %c0_7, %c0_8] : memref<1x1x128xf32, #tpu.memory_space<vmem>>, vector<1x1x128xf32>
    tpu.vector_store %arg3[%c0_6, %c0_7, %c0_8], %17 {strides = array<i32>} : memref<1x1x128xf32, #tpu.memory_space<vmem>>, vector<1x1x128xf32>,
    %c0_9 = arith.constant 0 : index
    %c0_10 = arith.constant 0 : index
    %c0_11 = arith.constant 0 : index
    %19 = vector.load %arg4[%c0_9, %c0_10, %c0_11] : memref<1x128x128xf32, #tpu.memory_space<vmem>>, vector<1x128x128xf32>
    %cst_12 = arith.constant dense<0.000000e+00> : vector<128x128xf32>
    %20 = tpu.matmul %12, %12, %cst_12 {dimension_numbers = #tpu.dot_dimension_numbers<[0], [0], [1], [1], [0, 1, 1, 1], [], []>, precision = #tpu.contract_precision<fp32>} : vector<8x128xf32>, vector<8x128xf32>, vector<128x128xf32> -> vector<128x128xf32>
    %21 = vector.shape_cast %20 : vector<128x128xf32> to vector<1x128x128xf32>
    %22 = arith.addf %19, %21 : vector<1x128x128xf32>
    %c0_13 = arith.constant 0 : index
    %c0_14 = arith.constant 0 : index
    %c0_15 = arith.constant 0 : index
    %23 = vector.load %arg4[%c0_13, %c0_14, %c0_15] : memref<1x128x128xf32, #tpu.memory_space<vmem>>, vector<1x128x128xf32>
    tpu.vector_store %arg4[%c0_13, %c0_14, %c0_15], %22 {strides = array<i32>} : memref<1x128x128xf32, #tpu.memory_space<vmem>>, vector<1x128x128xf32>,
    return
  }
  func.func @transform_0(%arg0: i32, %arg1: i32) -> (i32, i32) {
    %c2_i32 = arith.constant 2 : i32
    %0 = arith.muli %arg0, %c2_i32 : i32
    %1 = arith.addi %0, %arg1 : i32
    %c2_i32_0 = arith.constant 2 : i32
    %2 = arith.minsi %1, %c2_i32_0 : i32
    %c0_i32 = arith.constant 0 : i32
    %c0_i32_1 = arith.constant 0 : i32
    return %2, %c0_i32 : i32, i32
  }
  func.func @transform_1(%arg0: i32, %arg1: i32) -> (i32, i32, i32) {
    %c0_i32 = arith.constant 0 : i32
    %c0_i32_0 = arith.constant 0 : i32
    %c0_i32_1 = arith.constant 0 : i32
    return %arg0, %c0_i32, %c0_i32_0 : i32, i32, i32
  }
  func.func @transform_2(%arg0: i32, %arg1: i32) -> (i32, i32, i32) {
    %c0_i32 = arith.constant 0 : i32
    %c0_i32_0 = arith.constant 0 : i32
    %c0_i32_1 = arith.constant 0 : i32
    return %arg0, %c0_i32, %c0_i32_0 : i32, i32, i32
  }
}

</mosaic_0001>

<llo_original>
// kernel: tpu_custom_call.1
$region0: #{tpu_custom_call.1}
  #allocation0 [shape = 'u32[]', space=smem, size = 0x4, offset = 0x4, fixed_abs, tag = 'smem constant byte address 0x4 - core index']
  #allocation1 [shape = 'u32[144,128]{1,0:T(1,128)}', space=vmem, size = 0x12000, scoped, tag = 'internal scratch']
  %s0 = inlined_call_operand.hbm [shape: f32[18,128], index: 0, kind: input, shape index: {}]
  %s1 = inlined_call_operand.hbm [shape: f32[2,1,128], index: 1, kind: output, shape index: {0}]
  %s2 = inlined_call_operand.hbm [shape: f32[2,128,128], index: 2, kind: output, shape index: {1}]
  %3 = xla_tuple %s1, %s2
  %s4 = sld [smem:[#allocation0]]
  $region53: #{tpu_custom_call.1} parent=0
    _
  %s6 = ssub.s32 1, %s4
  %s7 = scalar_select 0, %s6, %s4
  $region1: #{tpu_custom_call.1} parent=0
    #allocation2 [shape = 'u8[8192]{0}', space=vmem, size = 0x2000, scoped, tag = 'input window, operand 0']
    #allocation3 [shape = 's32[2]{0}', space=sflag, size = 0x8, scoped, tag = 'scoped memory for tpu_custom_call.1']
    #allocation4 [shape = 's32[2]{0}', space=sflag, size = 0x8, scoped, tag = 'scoped memory for tpu_custom_call.1']
    #allocation5 [shape = 'u8[1024]{0}', space=vmem, size = 0x400, scoped, tag = 'output window, operand 0']
    #allocation6 [shape = 'u8[131072]{0}', space=vmem, size = 0x20000, scoped, tag = 'output window, operand 1']
    #allocation7 [shape = 's32[2]{0}', space=sflag, size = 0x8, scoped, tag = 'scoped memory for tpu_custom_call.1']
    %8 = vsyncpa [#allocation3], 0
    %s9 = scalar_lea.sflag [#allocation3], 1
    %10 = vsyncpa %s9, 0
    %11 = vsyncpa [#allocation4], 0
    %s12 = scalar_lea.sflag [#allocation4], 1
    %13 = vsyncpa %s12, 0
    %14 = vsyncpa [#allocation7], 0
    %s15 = scalar_lea.sflag [#allocation7], 1
    %16 = vsyncpa %s15, 0
    loop: start=0, step=1, limit=6
    $region2: #{tpu_custom_call.1} parent=1 // loop_pre_header
      _
    $region3: #{tpu_custom_call.1} parent=1 // loop_header
      %s18 = sphi 0, %s22
      %p19 = scmp.ge.s32.totalorder %s18, 6
      %s25 = sphi 0, %s37
      %s26 = sphi 0, %s33
      %s27 = sphi 0, %s25
      %s28 = sphi 0, %s26
      %s29 = sphi 0, %s27
      %s30 = sphi 0, %s28
      %s48 = sphi 0, %s50
      %s51 = sphi 0, %s48
      %s52 = sphi 0, %s51
      %s68 = sphi 0, %s52
      %s74 = sphi 0, %s76
      %s77 = sphi 0, %s74
      %s78 = sphi 0, %s77
      %s94 = sphi 0, %s78
      %s100 = sphi 0, %s102
      %s103 = sphi 0, %s100
      %s104 = sphi 0, %s103
      %s120 = sphi 0, %s104
    $region4: #{tpu_custom_call.1} parent=1 // loop_header_branch
      %21 = sbr.rel (%p19) target = $region8
    $region5: #{tpu_custom_call.1} parent=1 // loop_body
      %s23 = ssub.s32 %s18, 1
      %s24 = ssub.s32 %s18, 2
      %s31 = sadd.s32 1, %s26
      %p32 = scmp.ge.s32.totalorder %s31, 2
      %s33 = scalar_select %p32, 0, %s31
      %s34 = sadd.s32 1, %s25
      %s35 = scalar_select %p32, %s34, %s25
      %p36 = scmp.ge.s32.totalorder %s35, 2
      %s37 = scalar_select %p36, 0, %s35
      %s38 = smul.u32 %s25, 2
      %s39 = sadd.s32 %s38, %s26
      %p40 = scmp.lt.s32.totalorder %s39, 2
      %s41 = scalar_select %p40, %s39, 2
      %s42 = smul.u32 %s37, 2
      %s43 = sadd.s32 %s42, %s33
      %p44 = scmp.lt.s32.totalorder %s43, 2
      %s45 = scalar_select %p44, %s43, 2
      %s46 = ssub.s32 %s41, %s45
      %p47 = scmp.eq.s32.totalorder %s46, 0
      %s49 = sadd.s32 %s48, 1
      %s50 = scalar_select %p47, %s48, %s49
      %p53 = pneg %p47
      %p54 = scmp.eq.s32.totalorder %s18, 3
      %p55 = por %p53, %p54
      %p56 = scmp.ne.s32.totalorder %s48, %s51
      %p57 = scmp.eq.s32.totalorder %s18, 0
      %p58 = por %p56, %p57
      %p59 = scmp.ne.s32.totalorder %s48, %s51
      %p60 = scmp.eq.s32.totalorder %s23, 3
      %p61 = por %p59, %p60
      %p62 = scmp.ne.s32.totalorder %s51, %s52
      %p63 = scmp.eq.s32.totalorder %s23, 0
      %p64 = por %p62, %p63
      %p65 = scmp.ne.s32.totalorder %s51, %s52
      %p66 = scmp.eq.s32.totalorder %s24, 3
      %p67 = por %p65, %p66
      %p69 = scmp.ne.s32.totalorder %s52, %s68
      %p70 = scmp.eq.s32.totalorder %s24, 0
      %p71 = por %p69, %p70
      %s72 = ssub.s32 %s25, %s37
      %p73 = scmp.eq.s32.totalorder %s72, 0
      %s75 = sadd.s32 %s74, 1
      %s76 = scalar_select %p73, %s74, %s75
      %p79 = pneg %p73
      %p80 = scmp.eq.s32.totalorder %s18, 3
      %p81 = por %p79, %p80
      %p82 = scmp.ne.s32.totalorder %s74, %s77
      %p83 = scmp.eq.s32.totalorder %s18, 0
      %p84 = por %p82, %p83
      %p85 = scmp.ne.s32.totalorder %s74, %s77
      %p86 = scmp.eq.s32.totalorder %s23, 3
      %p87 = por %p85, %p86
      %p88 = scmp.ne.s32.totalorder %s77, %s78
      %p89 = scmp.eq.s32.totalorder %s23, 0
      %p90 = por %p88, %p89
      %p91 = scmp.ne.s32.totalorder %s77, %s78
      %p92 = scmp.eq.s32.totalorder %s24, 3
      %p93 = por %p91, %p92
      %p95 = scmp.ne.s32.totalorder %s78, %s94
      %p96 = scmp.eq.s32.totalorder %s24, 0
      %p97 = por %p95, %p96
      %s98 = ssub.s32 %s25, %s37
      %p99 = scmp.eq.s32.totalorder %s98, 0
      %s101 = sadd.s32 %s100, 1
      %s102 = scalar_select %p99, %s100, %s101
      %p105 = pneg %p99
      %p106 = scmp.eq.s32.totalorder %s18, 3
      %p107 = por %p105, %p106
      %p108 = scmp.ne.s32.totalorder %s100, %s103
      %p109 = scmp.eq.s32.totalorder %s18, 0
      %p110 = por %p108, %p109
      %p111 = scmp.ne.s32.totalorder %s100, %s103
      %p112 = scmp.eq.s32.totalorder %s23, 3
      %p113 = por %p111, %p112
      %p114 = scmp.ne.s32.totalorder %s103, %s104
      %p115 = scmp.eq.s32.totalorder %s23, 0
      %p116 = por %p114, %p115
      %p117 = scmp.ne.s32.totalorder %s103, %s104
      %p118 = scmp.eq.s32.totalorder %s24, 3
      %p119 = por %p117, %p118
      %p121 = scmp.ne.s32.totalorder %s104, %s120
      %p122 = scmp.eq.s32.totalorder %s24, 0
      %p123 = por %p121, %p122
      %p124 = scmp.le.s32.totalorder 1, %s18
      %p125 = scmp.lt.s32.totalorder %s18, 5
      %p126 = pnand %p124, %p125
      %p127 = pneg %p126
      // Predicated region
      $region9: #{tpu_custom_call.1} parent=5 // pred_check
        _
      $region10: #{tpu_custom_call.1} parent=5 // pred_check_branch
        %129 = sbr.rel (%p126) target = $region12
      $region11: #{tpu_custom_call.1} parent=5 // pred_region
        %s130 = ssub.s32 %s18, 1
      $region12: #{tpu_custom_call.1} parent=5 // pred_fallthru
        _
      %p131 = scmp.lt.s32.totalorder %s18, 4
      // Predicated region
      $region13: #{tpu_custom_call.1} parent=5 // pred_check
        %p132 = pneg %p131
      $region14: #{tpu_custom_call.1} parent=5 // pred_check_branch
        %134 = sbr.rel (%p132) target = $region16
      $region15: #{tpu_custom_call.1} parent=5 // pred_region
        // Predicated region
        $region17: #{tpu_custom_call.1} parent=15 // pred_check
          %p135 = pneg %p58
        $region18: #{tpu_custom_call.1} parent=15 // pred_check_branch
          %137 = sbr.rel (%p135) target = $region20
        $region19: #{tpu_custom_call.1} parent=15 // pred_region
          %s138 = sand.u32 %s48, 1
          %s139 = scalar_lea.sflag [#allocation3], %s138
          %s140 = sand.u32 %s48, 1
          %s141 = smul.addr %s140, 8
          %s142 = scalar_lea.vmem [#allocation2], %s141
          %s143 = smul.u32 %s25, 2
          %s144 = sadd.s32 %s143, %s26
          %p145 = scmp.lt.s32.totalorder %s144, 2
          %s146 = scalar_select %p145, %s144, 2
          %s148 = ssub.s32 128, 128
          %149 = vsyncadd %s139, %s148
          %s150 = smul.addr %s146, 128
          %s151 = scalar_lea.hbm %s0, %s150
          %s153 = sshll.u32 %s142, 4
          %s154 = int_to_ptr.vmem [resolvable:$true] %s153
          %156 = dma.hbm_to_vmem [thread:$0]  %s151, 128, %s154, %s139
        $region20: #{tpu_custom_call.1} parent=15 // pred_fallthru
          _
      $region16: #{tpu_custom_call.1} parent=5 // pred_fallthru
        _
      %p157 = scmp.le.s32.totalorder 1, %s18
      %p158 = scmp.lt.s32.totalorder %s18, 5
      %p159 = pnand %p157, %p158
      %p160 = pneg %p159
      // Predicated region
      $region21: #{tpu_custom_call.1} parent=5 // pred_check
        _
      $region22: #{tpu_custom_call.1} parent=5 // pred_check_branch
        %162 = sbr.rel (%p159) target = $region24
      $region23: #{tpu_custom_call.1} parent=5 // pred_region
        %s163 = ssub.s32 %s18, 1
        %s164 = sand.u32 %s51, 1
        %s165 = scalar_lea.sflag [#allocation3], %s164
        %s166 = sand.u32 %s51, 1
        %s167 = smul.addr %s166, 8
        %s168 = scalar_lea.vmem [#allocation2], %s167
        // Predicated region
        $region25: #{tpu_custom_call.1} parent=23 // pred_check
          %p169 = pneg %p64
        $region26: #{tpu_custom_call.1} parent=23 // pred_check_branch
          %171 = sbr.rel (%p169) target = $region28
        $region27: #{tpu_custom_call.1} parent=23 // pred_region
          %172 = dma.done %s165, 128
        $region28: #{tpu_custom_call.1} parent=23 // pred_fallthru
          _
        %s173 = sand.u32 %s51, 1
        %s174 = scalar_lea.sflag [#allocation3], %s173
        %s175 = sand.u32 %s51, 1
        %s176 = smul.addr %s175, 8
        %s177 = scalar_lea.vmem [#allocation2], %s176
        %p178 = pneg %p64
        %p179 = pneg %p61
        %p180 = pneg %p90
        %p181 = pneg %p87
        %s182 = sand.u32 %s77, 1
        %s183 = scalar_lea.sflag [#allocation4], %s182
        %s184 = sand.u32 %s77, 1
        %s185 = scalar_lea.vmem [#allocation5], %s184
        %p186 = pneg %p116
        %p187 = pneg %p113
        %s188 = sand.u32 %s103, 1
        %s189 = scalar_lea.sflag [#allocation7], %s188
        %s190 = sand.u32 %s103, 1
        %s191 = smul.addr %s190, 128
        %s192 = scalar_lea.vmem [#allocation6], %s191
        %s193 = smul.u32 %s27, 2
        %s194 = sadd.s32 %s193, %s28
        %p195 = scmp.lt.s32.totalorder %s194, 2
        %s196 = scalar_select %p195, %s194, 2
        %p197 = scmp.eq.s32.totalorder %s28, 0
        // Predicated region
        $region29: #{tpu_custom_call.1} parent=23 // pred_check
          %p198 = pneg %p197
        $region30: #{tpu_custom_call.1} parent=23 // pred_check_branch
          %200 = sbr.rel (%p198) target = $region32
        $region31: #{tpu_custom_call.1} parent=23 // pred_region
          %201 = vst [vmem:[%s185] sm:$0x1] 0.0
          %202 = vst [vmem:[%s192] sm:$0xff] 0.0
          %203 = vst [vmem:[%s192 + $0x8] sm:$0xff] 0.0
          %204 = vst [vmem:[%s192 + $0x10] sm:$0xff] 0.0
          %205 = vst [vmem:[%s192 + $0x18] sm:$0xff] 0.0
          %206 = vst [vmem:[%s192 + $0x20] sm:$0xff] 0.0
          %207 = vst [vmem:[%s192 + $0x28] sm:$0xff] 0.0
          %208 = vst [vmem:[%s192 + $0x30] sm:$0xff] 0.0
          %209 = vst [vmem:[%s192 + $0x38] sm:$0xff] 0.0
          %210 = vst [vmem:[%s192 + $0x40] sm:$0xff] 0.0
          %211 = vst [vmem:[%s192 + $0x48] sm:$0xff] 0.0
          %212 = vst [vmem:[%s192 + $0x50] sm:$0xff] 0.0
          %213 = vst [vmem:[%s192 + $0x58] sm:$0xff] 0.0
          %214 = vst [vmem:[%s192 + $0x60] sm:$0xff] 0.0
          %215 = vst [vmem:[%s192 + $0x68] sm:$0xff] 0.0
          %216 = vst [vmem:[%s192 + $0x70] sm:$0xff] 0.0
          %217 = vst [vmem:[%s192 + $0x78] sm:$0xff] 0.0
        $region32: #{tpu_custom_call.1} parent=23 // pred_fallthru
          _
        %v218 = vld [vmem:[%s168] sm:$0xff]
        %s219 = smul.u32 %s27, 2
        %s220 = sadd.s32 %s219, %s28
        %s221 = smul.u32 %s220, 8
        %s222 = ssub.s32 18, %s221
        %v223 = vlaneseq
        %v224 = vshrl.u32 %v223, 7
        %v225 = vstv %s222
        %vm226 = vcmp.lt.s32.totalorder %v224, %v225
        %v227 = vsel %vm226, %v218, 0.0
        %v228 = vld [vmem:[%s185] sm:$0x1]
        %v229 = vrot.slane %v227, 4
        %v230 = vadd.f32 %v227, %v229
        %v231 = vrot.slane %v230, 2
        %v232 = vadd.f32 %v230, %v231
        %v233 = vrot.slane %v232, 1
        %v234 = vadd.f32 %v232, %v233
        %v235 = vadd.f32 %v228, %v234
        %236 = vst [vmem:[%s185] sm:$0x1] %v235
        %v237 = vld [vmem:[%s192] sm:$0xff]
        %v238 = vld [vmem:[%s192 + $0x8] sm:$0xff]
        %v239 = vld [vmem:[%s192 + $0x10] sm:$0xff]
        %v240 = vld [vmem:[%s192 + $0x18] sm:$0xff]
        %v241 = vld [vmem:[%s192 + $0x20] sm:$0xff]
        %v242 = vld [vmem:[%s192 + $0x28] sm:$0xff]
        %v243 = vld [vmem:[%s192 + $0x30] sm:$0xff]
        %v244 = vld [vmem:[%s192 + $0x38] sm:$0xff]
        %v245 = vld [vmem:[%s192 + $0x40] sm:$0xff]
        %v246 = vld [vmem:[%s192 + $0x48] sm:$0xff]
        %v247 = vld [vmem:[%s192 + $0x50] sm:$0xff]
        %v248 = vld [vmem:[%s192 + $0x58] sm:$0xff]
        %v249 = vld [vmem:[%s192 + $0x60] sm:$0xff]
        %v250 = vld [vmem:[%s192 + $0x68] sm:$0xff]
        %v251 = vld [vmem:[%s192 + $0x70] sm:$0xff]
        %v252 = vld [vmem:[%s192 + $0x78] sm:$0xff]
        %253 = vxpose.xlu0.b32.start [1/16] %v227, 128
        %254 = vxpose.xlu0.b32.cont [2/16] 0.0, 128
        %255 = vxpose.xlu0.b32.cont [3/16] 0.0, 128
        %256 = vxpose.xlu0.b32.cont [4/16] 0.0, 128
        %257 = vxpose.xlu0.b32.cont [5/16] 0.0, 128
        %258 = vxpose.xlu0.b32.cont [6/16] 0.0, 128
        %259 = vxpose.xlu0.b32.cont [7/16] 0.0, 128
        %260 = vxpose.xlu0.b32.cont [8/16] 0.0, 128
        %261 = vxpose.xlu0.b32.cont [9/16] 0.0, 128
        %262 = vxpose.xlu0.b32.cont [10/16] 0.0, 128
        %263 = vxpose.xlu0.b32.cont [11/16] 0.0, 128
        %264 = vxpose.xlu0.b32.cont [12/16] 0.0, 128
        %265 = vxpose.xlu0.b32.cont [13/16] 0.0, 128
        %266 = vxpose.xlu0.b32.cont [14/16] 0.0, 128
        %267 = vxpose.xlu0.b32.cont [15/16] 0.0, 128
        %268 = vxpose.xlu0.b32.end [16/16] 0.0, 128
        %v269 = vpop.trf.xlu0
        %v270 = vpop.trf.xlu0
        %v271 = vpop.trf.xlu0
        %v272 = vpop.trf.xlu0
        %v273 = vpop.trf.xlu0
        %v274 = vpop.trf.xlu0
        %v275 = vpop.trf.xlu0
        %v276 = vpop.trf.xlu0
        %v277 = vpop.trf.xlu0
        %v278 = vpop.trf.xlu0
        %v279 = vpop.trf.xlu0
        %v280 = vpop.trf.xlu0
        %v281 = vpop.trf.xlu0
        %v282 = vpop.trf.xlu0
        %v283 = vpop.trf.xlu0
        %v284 = vpop.trf.xlu0
        %vm285 = vcmask 64512
        %v287 = vsel %vm285, %v269, 0
        %v290 = vsel %vm285, %v270, 0
        %v293 = vsel %vm285, %v271, 0
        %v296 = vsel %vm285, %v272, 0
        %v299 = vsel %vm285, %v273, 0
        %v302 = vsel %vm285, %v274, 0
        %v305 = vsel %vm285, %v275, 0
        %v308 = vsel %vm285, %v276, 0
        %v311 = vsel %vm285, %v277, 0
        %v314 = vsel %vm285, %v278, 0
        %v317 = vsel %vm285, %v279, 0
        %v320 = vsel %vm285, %v280, 0
        %v323 = vsel %vm285, %v281, 0
        %v326 = vsel %vm285, %v282, 0
        %v329 = vsel %vm285, %v283, 0
        %v332 = vsel %vm285, %v284, 0
        %334 = vmatprep.subr.mxu0 0.0
        %v335 = vand.u32 %v227, 4294901760
        %336 = vmatpush1.msra.mxu0 %v335
        %337 = vmatprep.subr.mxu0 0.0
        %338 = vmatpush1.msra.mxu0 0.0
        %339 = vmatprep.subr.mxu0 0.0
        %340 = vmatpush1.msra.mxu0 0.0
        %341 = vmatprep.subr.mxu0 0.0
        %342 = vmatpush1.msra.mxu0 0.0
        %343 = vmatprep.subr.mxu0 0.0
        %344 = vmatpush1.msra.mxu0 0.0
        %345 = vmatprep.subr.mxu0 0.0
        %346 = vmatpush1.msra.mxu0 0.0
        %347 = vmatprep.subr.mxu0 0.0
        %348 = vmatpush1.msra.mxu0 0.0
        %349 = vmatprep.subr.mxu0 0.0
        %350 = vmatpush1.msra.mxu0 0.0
        %351 = vmatprep.subr.mxu0 0.0
        %352 = vmatpush1.msra.mxu0 0.0
        %353 = vmatprep.subr.mxu0 0.0
        %354 = vmatpush1.msra.mxu0 0.0
        %355 = vmatprep.subr.mxu0 0.0
        %356 = vmatpush1.msra.mxu0 0.0
        %357 = vmatprep.subr.mxu0 0.0
        %358 = vmatpush1.msra.mxu0 0.0
        %359 = vmatprep.subr.mxu0 0.0
        %360 = vmatpush1.msra.mxu0 0.0
        %361 = vmatprep.subr.mxu0 0.0
        %362 = vmatpush1.msra.mxu0 0.0
        %363 = vmatprep.subr.mxu0 0.0
        %364 = vmatpush1.msra.mxu0 0.0
        %365 = vmatprep.subr.mxu0 0.0
        %366 = vmatpush1.msra.mxu0 0.0
        %367 = vmatprep.subr.mxu0 0.0
        %368 = vmatpush1.msra.mxu0 0.0
        %369 = vmatprep.subr.mxu0 0.0
        %370 = vmatpush1.msra.mxu0 0.0
        %371 = vmatprep.subr.mxu0 0.0
        %372 = vmatpush1.msra.mxu0 0.0
        %373 = vmatprep.subr.mxu0 0.0
        %374 = vmatpush1.msra.mxu0 0.0
        %375 = vmatprep.subr.mxu0 0.0
        %376 = vmatpush1.msra.mxu0 0.0
        %377 = vmatprep.subr.mxu0 0.0
        %378 = vmatpush1.msra.mxu0 0.0
        %379 = vmatprep.subr.mxu0 0.0
        %380 = vmatpush1.msra.mxu0 0.0
        %381 = vmatprep.subr.mxu0 0.0
        %382 = vmatpush1.msra.mxu0 0.0
        %383 = vmatprep.subr.mxu0 0.0
        %384 = vmatpush1.msra.mxu0 0.0
        %385 = vmatprep.subr.mxu0 0.0
        %386 = vmatpush1.msra.mxu0 0.0
        %387 = vmatprep.subr.mxu0 0.0
        %388 = vmatpush1.msra.mxu0 0.0
        %389 = vmatprep.subr.mxu0 0.0
        %390 = vmatpush1.msra.mxu0 0.0
        %391 = vmatprep.subr.mxu0 0.0
        %392 = vmatpush1.msra.mxu0 0.0
        %393 = vmatprep.subr.mxu0 0.0
        %394 = vmatpush1.msra.mxu0 0.0
        %395 = vmatprep.subr.mxu0 0.0
        %396 = vmatpush1.msra.mxu0 0.0
        %397 = vmatprep.subr.mxu0 0.0
        %398 = vmatpush1.msra.mxu0 0.0
        %399 = vmatprep.mubr.f32.mxu0 0.0
        %v400 = vand.u32 %v287, 4294901760
        %v401 = vsub.f32 %v287, %v400
        %v402 = vand.u32 %v401, 4294901760
        %v403 = vsub.f32 %v401, %v402
        %v404 = vand.u32 %v403, 4294901760
        %405 = vmatmul.mubr.f32.gmra.mrb[0].mxu0 %v404
        %v406 = vpop.f32.mrb[0].mxu0
        %v407 = vadd.f32 0.0, %v406
        %v408 = vpop.f32.mrb[0].mxu0
        %409 = vmatprep.mubr.f32.mxu0 0.0
        %v410 = vand.u32 %v290, 4294901760
        %v411 = vsub.f32 %v290, %v410
        %v412 = vand.u32 %v411, 4294901760
        %v413 = vsub.f32 %v411, %v412
        %v414 = vand.u32 %v413, 4294901760
        %415 = vmatmul.mubr.f32.gmra.mrb[0].mxu0 %v414
        %v416 = vpop.f32.mrb[0].mxu0
        %v417 = vadd.f32 0.0, %v416
        %v418 = vpop.f32.mrb[0].mxu0
        %419 = vmatprep.mubr.f32.mxu0 0.0
        %v420 = vand.u32 %v293, 4294901760
        %v421 = vsub.f32 %v293, %v420
        %v422 = vand.u32 %v421, 4294901760
        %v423 = vsub.f32 %v421, %v422
        %v424 = vand.u32 %v423, 4294901760
        %425 = vmatmul.mubr.f32.gmra.mrb[0].mxu0 %v424
        %v426 = vpop.f32.mrb[0].mxu0
        %v427 = vadd.f32 0.0, %v426
        %v428 = vpop.f32.mrb[0].mxu0
        %429 = vmatprep.mubr.f32.mxu0 0.0
        %v430 = vand.u32 %v296, 4294901760
        %v431 = vsub.f32 %v296, %v430
        %v432 = vand.u32 %v431, 4294901760
        %v433 = vsub.f32 %v431, %v432
        %v434 = vand.u32 %v433, 4294901760
        %435 = vmatmul.mubr.f32.gmra.mrb[0].mxu0 %v434
        %v436 = vpop.f32.mrb[0].mxu0
        %v437 = vadd.f32 0.0, %v436
        %v438 = vpop.f32.mrb[0].mxu0
        %439 = vmatprep.mubr.f32.mxu0 0.0
        %v440 = vand.u32 %v299, 4294901760
        %v441 = vsub.f32 %v299, %v440
        %v442 = vand.u32 %v441, 4294901760
        %v443 = vsub.f32 %v441, %v442
        %v444 = vand.u32 %v443, 4294901760
        %445 = vmatmul.mubr.f32.gmra.mrb[0].mxu0 %v444
        %v446 = vpop.f32.mrb[0].mxu0
        %v447 = vadd.f32 0.0, %v446
        %v448 = vpop.f32.mrb[0].mxu0
        %449 = vmatprep.mubr.f32.mxu0 0.0
        %v450 = vand.u32 %v302, 4294901760
        %v451 = vsub.f32 %v302, %v450
        %v452 = vand.u32 %v451, 4294901760
        %v453 = vsub.f32 %v451, %v452
        %v454 = vand.u32 %v453, 4294901760
        %455 = vmatmul.mubr.f32.gmra.mrb[0].mxu0 %v454
        %v456 = vpop.f32.mrb[0].mxu0
        %v457 = vadd.f32 0.0, %v456
        %v458 = vpop.f32.mrb[0].mxu0
        %459 = vmatprep.mubr.f32.mxu0 0.0
        %v460 = vand.u32 %v305, 4294901760
        %v461 = vsub.f32 %v305, %v460
        %v462 = vand.u32 %v461, 4294901760
        %v463 = vsub.f32 %v461, %v462
        %v464 = vand.u32 %v463, 4294901760
        %465 = vmatmul.mubr.f32.gmra.mrb[0].mxu0 %v464
        %v466 = vpop.f32.mrb[0].mxu0
        %v467 = vadd.f32 0.0, %v466
        %v468 = vpop.f32.mrb[0].mxu0
        %469 = vmatprep.mubr.f32.mxu0 0.0
        %v470 = vand.u32 %v308, 4294901760
        %v471 = vsub.f32 %v308, %v470
        %v472 = vand.u32 %v471, 4294901760
        %v473 = vsub.f32 %v471, %v472
        %v474 = vand.u32 %v473, 4294901760
        %475 = vmatmul.mubr.f32.gmra.mrb[0].mxu0 %v474
        %v476 = vpop.f32.mrb[0].mxu0
        %v477 = vadd.f32 0.0, %v476
        %v478 = vpop.f32.mrb[0].mxu0
        %479 = vmatprep.mubr.f32.mxu0 0.0
        %v480 = vand.u32 %v311, 4294901760
        %v481 = vsub.f32 %v311, %v480
        %v482 = vand.u32 %v481, 4294901760
        %v483 = vsub.f32 %v481, %v482
        %v484 = vand.u32 %v483, 4294901760
        %485 = vmatmul.mubr.f32.gmra.mrb[0].mxu0 %v484
        %v486 = vpop.f32.mrb[0].mxu0
        %v487 = vadd.f32 0.0, %v486
        %v488 = vpop.f32.mrb[0].mxu0
        %489 = vmatprep.mubr.f32.mxu0 0.0
        %v490 = vand.u32 %v314, 4294901760
        %v491 = vsub.f32 %v314, %v490
        %v492 = vand.u32 %v491, 4294901760
        %v493 = vsub.f32 %v491, %v492
        %v494 = vand.u32 %v493, 4294901760
        %495 = vmatmul.mubr.f32.gmra.mrb[0].mxu0 %v494
        %v496 = vpop.f32.mrb[0].mxu0
        %v497 = vadd.f32 0.0, %v496
        %v498 = vpop.f32.mrb[0].mxu0
        %499 = vmatprep.mubr.f32.mxu0 0.0
        %v500 = vand.u32 %v317, 4294901760
        %v501 = vsub.f32 %v317, %v500
        %v502 = vand.u32 %v501, 4294901760
        %v503 = vsub.f32 %v501, %v502
        %v504 = vand.u32 %v503, 4294901760
        %505 = vmatmul.mubr.f32.gmra.mrb[0].mxu0 %v504
        %v506 = vpop.f32.mrb[0].mxu0
        %v507 = vadd.f32 0.0, %v506
        %v508 = vpop.f32.mrb[0].mxu0
        %509 = vmatprep.mubr.f32.mxu0 0.0
        %v510 = vand.u32 %v320, 4294901760
        %v511 = vsub.f32 %v320, %v510
        %v512 = vand.u32 %v511, 4294901760
        %v513 = vsub.f32 %v511, %v512
        %v514 = vand.u32 %v513, 4294901760
        %515 = vmatmul.mubr.f32.gmra.mrb[0].mxu0 %v514
        %v516 = vpop.f32.mrb[0].mxu0
        %v517 = vadd.f32 0.0, %v516
        %v518 = vpop.f32.mrb[0].mxu0
        %519 = vmatprep.mubr.f32.mxu0 0.0
        %v520 = vand.u32 %v323, 4294901760
        %v521 = vsub.f32 %v323, %v520
        %v522 = vand.u32 %v521, 4294901760
        %v523 = vsub.f32 %v521, %v522
        %v524 = vand.u32 %v523, 4294901760
        %525 = vmatmul.mubr.f32.gmra.mrb[0].mxu0 %v524
        %v526 = vpop.f32.mrb[0].mxu0
        %v527 = vadd.f32 0.0, %v526
        %v528 = vpop.f32.mrb[0].mxu0
        %529 = vmatprep.mubr.f32.mxu0 0.0
        %v530 = vand.u32 %v326, 4294901760
        %v531 = vsub.f32 %v326, %v530
        %v532 = vand.u32 %v531, 4294901760
        %v533 = vsub.f32 %v531, %v532
        %v534 = vand.u32 %v533, 4294901760
        %535 = vmatmul.mubr.f32.gmra.mrb[0].mxu0 %v534
        %v536 = vpop.f32.mrb[0].mxu0
        %v537 = vadd.f32 0.0, %v536
        %v538 = vpop.f32.mrb[0].mxu0
        %539 = vmatprep.mubr.f32.mxu0 0.0
        %v540 = vand.u32 %v329, 4294901760
        %v541 = vsub.f32 %v329, %v540
        %v542 = vand.u32 %v541, 4294901760
        %v543 = vsub.f32 %v541, %v542
        %v544 = vand.u32 %v543, 4294901760
        %545 = vmatmul.mubr.f32.gmra.mrb[0].mxu0 %v544
        %v546 = vpop.f32.mrb[0].mxu0
        %v547 = vadd.f32 0.0, %v546
        %v548 = vpop.f32.mrb[0].mxu0
        %549 = vmatprep.mubr.f32.mxu0 0.0
        %v550 = vand.u32 %v332, 4294901760
        %v551 = vsub.f32 %v332, %v550
        %v552 = vand.u32 %v551, 4294901760
        %v553 = vsub.f32 %v551, %v552
        %v554 = vand.u32 %v553, 4294901760
        %555 = vmatmul.mubr.f32.gmra.mrb[0].mxu0 %v554
        %v556 = vpop.f32.mrb[0].mxu0
        %v557 = vadd.f32 0.0, %v556
        %v558 = vpop.f32.mrb[0].mxu0
        %559 = vdwg.mxu0
        %560 = vmatprep.subr.mxu0 0.0
        %v561 = vand.u32 %v227, 4294901760
        %v562 = vsub.f32 %v227, %v561
        %v563 = vand.u32 %v562, 4294901760
        %v564 = vsub.f32 %v562, %v563
        %v565 = vand.u32 %v564, 4294901760
        %566 = vmatpush1.msra.mxu0 %v565
        %567 = vmatprep.subr.mxu0 0.0
        %568 = vmatpush1.msra.mxu0 0.0
        %569 = vmatprep.subr.mxu0 0.0
        %570 = vmatpush1.msra.mxu0 0.0
        %571 = vmatprep.subr.mxu0 0.0
        %572 = vmatpush1.msra.mxu0 0.0
        %573 = vmatprep.subr.mxu0 0.0
        %574 = vmatpush1.msra.mxu0 0.0
        %575 = vmatprep.subr.mxu0 0.0
        %576 = vmatpush1.msra.mxu0 0.0
        %577 = vmatprep.subr.mxu0 0.0
        %578 = vmatpush1.msra.mxu0 0.0
        %579 = vmatprep.subr.mxu0 0.0
        %580 = vmatpush1.msra.mxu0 0.0
        %581 = vmatprep.subr.mxu0 0.0
        %582 = vmatpush1.msra.mxu0 0.0
        %583 = vmatprep.subr.mxu0 0.0
        %584 = vmatpush1.msra.mxu0 0.0
        %585 = vmatprep.subr.mxu0 0.0
        %586 = vmatpush1.msra.mxu0 0.0
        %587 = vmatprep.subr.mxu0 0.0
        %588 = vmatpush1.msra.mxu0 0.0
        %589 = vmatprep.subr.mxu0 0.0
        %590 = vmatpush1.msra.mxu0 0.0
        %591 = vmatprep.subr.mxu0 0.0
        %592 = vmatpush1.msra.mxu0 0.0
        %593 = vmatprep.subr.mxu0 0.0
        %594 = vmatpush1.msra.mxu0 0.0
        %595 = vmatprep.subr.mxu0 0.0
        %596 = vmatpush1.msra.mxu0 0.0
        %597 = vmatprep.subr.mxu0 0.0
        %598 = vmatpush1.msra.mxu0 0.0
        %599 = vmatprep.subr.mxu0 0.0
        %600 = vmatpush1.msra.mxu0 0.0
        %601 = vmatprep.subr.mxu0 0.0
        %602 = vmatpush1.msra.mxu0 0.0
        %603 = vmatprep.subr.mxu0 0.0
        %604 = vmatpush1.msra.mxu0 0.0
        %605 = vmatprep.subr.mxu0 0.0
        %606 = vmatpush1.msra.mxu0 0.0
        %607 = vmatprep.subr.mxu0 0.0
        %608 = vmatpush1.msra.mxu0 0.0
        %609 = vmatprep.subr.mxu0 0.0
        %610 = vmatpush1.msra.mxu0 0.0
        %611 = vmatprep.subr.mxu0 0.0
        %612 = vmatpush1.msra.mxu0 0.0
        %613 = vmatprep.subr.mxu0 0.0
        %614 = vmatpush1.msra.mxu0 0.0
        %615 = vmatprep.subr.mxu0 0.0
        %616 = vmatpush1.msra.mxu0 0.0
        %617 = vmatprep.subr.mxu0 0.0
        %618 = vmatpush1.msra.mxu0 0.0
        %619 = vmatprep.subr.mxu0 0.0
        %620 = vmatpush1.msra.mxu0 0.0
        %621 = vmatprep.subr.mxu0 0.0
        %622 = vmatpush1.msra.mxu0 0.0
        %623 = vmatprep.subr.mxu0 0.0
        %624 = vmatpush1.msra.mxu0 0.0
        %625 = vmatprep.subr.mxu0 0.0
        %626 = vmatpush1.msra.mxu0 0.0
        %627 = vmatprep.subr.mxu0 0.0
        %628 = vmatpush1.msra.mxu0 0.0
        %629 = vmatprep.mubr.f32.mxu0 0.0
        %v630 = vand.u32 %v287, 4294901760
        %631 = vmatmul.mubr.f32.gmra.mrb[0].mxu0 %v630
        %v632 = vpop.f32.mrb[0].mxu0
        %v633 = vadd.f32 %v407, %v632
        %v634 = vpop.f32.mrb[0].mxu0
        %635 = vmatprep.mubr.f32.mxu0 0.0
        %v636 = vand.u32 %v290, 4294901760
        %637 = vmatmul.mubr.f32.gmra.mrb[0].mxu0 %v636
        %v638 = vpop.f32.mrb[0].mxu0
        %v639 = vadd.f32 %v417, %v638
        %v640 = vpop.f32.mrb[0].mxu0
        %641 = vmatprep.mubr.f32.mxu0 0.0
        %v642 = vand.u32 %v293, 4294901760
        %643 = vmatmul.mubr.f32.gmra.mrb[0].mxu0 %v642
        %v644 = vpop.f32.mrb[0].mxu0
        %v645 = vadd.f32 %v427, %v644
        %v646 = vpop.f32.mrb[0].mxu0
        %647 = vmatprep.mubr.f32.mxu0 0.0
        %v648 = vand.u32 %v296, 4294901760
        %649 = vmatmul.mubr.f32.gmra.mrb[0].mxu0 %v648
        %v650 = vpop.f32.mrb[0].mxu0
        %v651 = vadd.f32 %v437, %v650
        %v652 = vpop.f32.mrb[0].mxu0
        %653 = vmatprep.mubr.f32.mxu0 0.0
        %v654 = vand.u32 %v299, 4294901760
        %655 = vmatmul.mubr.f32.gmra.mrb[0].mxu0 %v654
        %v656 = vpop.f32.mrb[0].mxu0
        %v657 = vadd.f32 %v447, %v656
        %v658 = vpop.f32.mrb[0].mxu0
        %659 = vmatprep.mubr.f32.mxu0 0.0
        %v660 = vand.u32 %v302, 4294901760
        %661 = vmatmul.mubr.f32.gmra.mrb[0].mxu0 %v660
        %v662 = vpop.f32.mrb[0].mxu0
        %v663 = vadd.f32 %v457, %v662
        %v664 = vpop.f32.mrb[0].mxu0
        %665 = vmatprep.mubr.f32.mxu0 0.0
        %v666 = vand.u32 %v305, 4294901760
        %667 = vmatmul.mubr.f32.gmra.mrb[0].mxu0 %v666
        %v668 = vpop.f32.mrb[0].mxu0
        %v669 = vadd.f32 %v467, %v668
        %v670 = vpop.f32.mrb[0].mxu0
        %671 = vmatprep.mubr.f32.mxu0 0.0
        %v672 = vand.u32 %v308, 4294901760
        %673 = vmatmul.mubr.f32.gmra.mrb[0].mxu0 %v672
        %v674 = vpop.f32.mrb[0].mxu0
        %v675 = vadd.f32 %v477, %v674
        %v676 = vpop.f32.mrb[0].mxu0
        %677 = vmatprep.mubr.f32.mxu0 0.0
        %v678 = vand.u32 %v311, 4294901760
        %679 = vmatmul.mubr.f32.gmra.mrb[0].mxu0 %v678
        %v680 = vpop.f32.mrb[0].mxu0
        %v681 = vadd.f32 %v487, %v680
        %v682 = vpop.f32.mrb[0].mxu0
        %683 = vmatprep.mubr.f32.mxu0 0.0
        %v684 = vand.u32 %v314, 4294901760
        %685 = vmatmul.mubr.f32.gmra.mrb[0].mxu0 %v684
        %v686 = vpop.f32.mrb[0].mxu0
        %v687 = vadd.f32 %v497, %v686
        %v688 = vpop.f32.mrb[0].mxu0
        %689 = vmatprep.mubr.f32.mxu0 0.0
        %v690 = vand.u32 %v317, 4294901760
        %691 = vmatmul.mubr.f32.gmra.mrb[0].mxu0 %v690
        %v692 = vpop.f32.mrb[0].mxu0
        %v693 = vadd.f32 %v507, %v692
        %v694 = vpop.f32.mrb[0].mxu0
        %695 = vmatprep.mubr.f32.mxu0 0.0
        %v696 = vand.u32 %v320, 4294901760
        %697 = vmatmul.mubr.f32.gmra.mrb[0].mxu0 %v696
        %v698 = vpop.f32.mrb[0].mxu0
        %v699 = vadd.f32 %v517, %v698
        %v700 = vpop.f32.mrb[0].mxu0
        %701 = vmatprep.mubr.f32.mxu0 0.0
        %v702 = vand.u32 %v323, 4294901760
        %703 = vmatmul.mubr.f32.gmra.mrb[0].mxu0 %v702
        %v704 = vpop.f32.mrb[0].mxu0
        %v705 = vadd.f32 %v527, %v704
        %v706 = vpop.f32.mrb[0].mxu0
        %707 = vmatprep.mubr.f32.mxu0 0.0
        %v708 = vand.u32 %v326, 4294901760
        %709 = vmatmul.mubr.f32.gmra.mrb[0].mxu0 %v708
        %v710 = vpop.f32.mrb[0].mxu0
        %v711 = vadd.f32 %v537, %v710
        %v712 = vpop.f32.mrb[0].mxu0
        %713 = vmatprep.mubr.f32.mxu0 0.0
        %v714 = vand.u32 %v329, 4294901760
        %715 = vmatmul.mubr.f32.gmra.mrb[0].mxu0 %v714
        %v716 = vpop.f32.mrb[0].mxu0
        %v717 = vadd.f32 %v547, %v716
        %v718 = vpop.f32.mrb[0].mxu0
        %719 = vmatprep.mubr.f32.mxu0 0.0
        %v720 = vand.u32 %v332, 4294901760
        %721 = vmatmul.mubr.f32.gmra.mrb[0].mxu0 %v720
        %v722 = vpop.f32.mrb[0].mxu0
        %v723 = vadd.f32 %v557, %v722
        %v724 = vpop.f32.mrb[0].mxu0
        %725 = vdwg.mxu0
        %726 = vmatprep.subr.mxu0 0.0
        %v727 = vand.u32 %v227, 4294901760
        %v728 = vsub.f32 %v227, %v727
        %729 = vmatpush1.msra.mxu0 %v728
        %730 = vmatprep.subr.mxu0 0.0
        %731 = vmatpush1.msra.mxu0 0.0
        %732 = vmatprep.subr.mxu0 0.0
        %733 = vmatpush1.msra.mxu0 0.0
        %734 = vmatprep.subr.mxu0 0.0
        %735 = vmatpush1.msra.mxu0 0.0
        %736 = vmatprep.subr.mxu0 0.0
        %737 = vmatpush1.msra.mxu0 0.0
        %738 = vmatprep.subr.mxu0 0.0
        %739 = vmatpush1.msra.mxu0 0.0
        %740 = vmatprep.subr.mxu0 0.0
        %741 = vmatpush1.msra.mxu0 0.0
        %742 = vmatprep.subr.mxu0 0.0
        %743 = vmatpush1.msra.mxu0 0.0
        %744 = vmatprep.subr.mxu0 0.0
        %745 = vmatpush1.msra.mxu0 0.0
        %746 = vmatprep.subr.mxu0 0.0
        %747 = vmatpush1.msra.mxu0 0.0
        %748 = vmatprep.subr.mxu0 0.0
        %749 = vmatpush1.msra.mxu0 0.0
        %750 = vmatprep.subr.mxu0 0.0
        %751 = vmatpush1.msra.mxu0 0.0
        %752 = vmatprep.subr.mxu0 0.0
        %753 = vmatpush1.msra.mxu0 0.0
        %754 = vmatprep.subr.mxu0 0.0
        %755 = vmatpush1.msra.mxu0 0.0
        %756 = vmatprep.subr.mxu0 0.0
        %757 = vmatpush1.msra.mxu0 0.0
        %758 = vmatprep.subr.mxu0 0.0
        %759 = vmatpush1.msra.mxu0 0.0
        %760 = vmatprep.subr.mxu0 0.0
        %761 = vmatpush1.msra.mxu0 0.0
        %762 = vmatprep.subr.mxu0 0.0
        %763 = vmatpush1.msra.mxu0 0.0
        %764 = vmatprep.subr.mxu0 0.0
        %765 = vmatpush1.msra.mxu0 0.0
        %766 = vmatprep.subr.mxu0 0.0
        %767 = vmatpush1.msra.mxu0 0.0
        %768 = vmatprep.subr.mxu0 0.0
        %769 = vmatpush1.msra.mxu0 0.0
        %770 = vmatprep.subr.mxu0 0.0
        %771 = vmatpush1.msra.mxu0 0.0
        %772 = vmatprep.subr.mxu0 0.0
        %773 = vmatpush1.msra.mxu0 0.0
        %774 = vmatprep.subr.mxu0 0.0
        %775 = vmatpush1.msra.mxu0 0.0
        %776 = vmatprep.subr.mxu0 0.0
        %777 = vmatpush1.msra.mxu0 0.0
        %778 = vmatprep.subr.mxu0 0.0
        %779 = vmatpush1.msra.mxu0 0.0
        %780 = vmatprep.subr.mxu0 0.0
        %781 = vmatpush1.msra.mxu0 0.0
        %782 = vmatprep.subr.mxu0 0.0
        %783 = vmatpush1.msra.mxu0 0.0
        %784 = vmatprep.subr.mxu0 0.0
        %785 = vmatpush1.msra.mxu0 0.0
        %786 = vmatprep.subr.mxu0 0.0
        %787 = vmatpush1.msra.mxu0 0.0
        %788 = vmatprep.subr.mxu0 0.0
        %789 = vmatpush1.msra.mxu0 0.0
        %790 = vmatprep.subr.mxu0 0.0
        %791 = vmatpush1.msra.mxu0 0.0
        %792 = vmatprep.mubr.f32.mxu0 0.0
        %v793 = vand.u32 %v287, 4294901760
        %v794 = vsub.f32 %v287, %v793
        %795 = vmatmul.mubr.f32.gmra.mrb[0].mxu0 %v794
        %v796 = vpop.f32.mrb[0].mxu0
        %v797 = vadd.f32 %v633, %v796
        %v798 = vpop.f32.mrb[0].mxu0
        %799 = vmatprep.mubr.f32.mxu0 0.0
        %v800 = vand.u32 %v290, 4294901760
        %v801 = vsub.f32 %v290, %v800
        %802 = vmatmul.mubr.f32.gmra.mrb[0].mxu0 %v801
        %v803 = vpop.f32.mrb[0].mxu0
        %v804 = vadd.f32 %v639, %v803
        %v805 = vpop.f32.mrb[0].mxu0
        %806 = vmatprep.mubr.f32.mxu0 0.0
        %v807 = vand.u32 %v293, 4294901760
        %v808 = vsub.f32 %v293, %v807
        %809 = vmatmul.mubr.f32.gmra.mrb[0].mxu0 %v808
        %v810 = vpop.f32.mrb[0].mxu0
        %v811 = vadd.f32 %v645, %v810
        %v812 = vpop.f32.mrb[0].mxu0
        %813 = vmatprep.mubr.f32.mxu0 0.0
        %v814 = vand.u32 %v296, 4294901760
        %v815 = vsub.f32 %v296, %v814
        %816 = vmatmul.mubr.f32.gmra.mrb[0].mxu0 %v815
        %v817 = vpop.f32.mrb[0].mxu0
        %v818 = vadd.f32 %v651, %v817
        %v819 = vpop.f32.mrb[0].mxu0
        %820 = vmatprep.mubr.f32.mxu0 0.0
        %v821 = vand.u32 %v299, 4294901760
        %v822 = vsub.f32 %v299, %v821
        %823 = vmatmul.mubr.f32.gmra.mrb[0].mxu0 %v822
        %v824 = vpop.f32.mrb[0].mxu0
        %v825 = vadd.f32 %v657, %v824
        %v826 = vpop.f32.mrb[0].mxu0
        %827 = vmatprep.mubr.f32.mxu0 0.0
        %v828 = vand.u32 %v302, 4294901760
        %v829 = vsub.f32 %v302, %v828
        %830 = vmatmul.mubr.f32.gmra.mrb[0].mxu0 %v829
        %v831 = vpop.f32.mrb[0].mxu0
        %v832 = vadd.f32 %v663, %v831
        %v833 = vpop.f32.mrb[0].mxu0
        %834 = vmatprep.mubr.f32.mxu0 0.0
        %v835 = vand.u32 %v305, 4294901760
        %v836 = vsub.f32 %v305, %v835
        %837 = vmatmul.mubr.f32.gmra.mrb[0].mxu0 %v836
        %v838 = vpop.f32.mrb[0].mxu0
        %v839 = vadd.f32 %v669, %v838
        %v840 = vpop.f32.mrb[0].mxu0
        %841 = vmatprep.mubr.f32.mxu0 0.0
        %v842 = vand.u32 %v308, 4294901760
        %v843 = vsub.f32 %v308, %v842
        %844 = vmatmul.mubr.f32.gmra.mrb[0].mxu0 %v843
        %v845 = vpop.f32.mrb[0].mxu0
        %v846 = vadd.f32 %v675, %v845
        %v847 = vpop.f32.mrb[0].mxu0
        %848 = vmatprep.mubr.f32.mxu0 0.0
        %v849 = vand.u32 %v311, 4294901760
        %v850 = vsub.f32 %v311, %v849
        %851 = vmatmul.mubr.f32.gmra.mrb[0].mxu0 %v850
        %v852 = vpop.f32.mrb[0].mxu0
        %v853 = vadd.f32 %v681, %v852
        %v854 = vpop.f32.mrb[0].mxu0
        %855 = vmatprep.mubr.f32.mxu0 0.0
        %v856 = vand.u32 %v314, 4294901760
        %v857 = vsub.f32 %v314, %v856
        %858 = vmatmul.mubr.f32.gmra.mrb[0].mxu0 %v857
        %v859 = vpop.f32.mrb[0].mxu0
        %v860 = vadd.f32 %v687, %v859
        %v861 = vpop.f32.mrb[0].mxu0
        %862 = vmatprep.mubr.f32.mxu0 0.0
        %v863 = vand.u32 %v317, 4294901760
        %v864 = vsub.f32 %v317, %v863
        %865 = vmatmul.mubr.f32.gmra.mrb[0].mxu0 %v864
        %v866 = vpop.f32.mrb[0].mxu0
        %v867 = vadd.f32 %v693, %v866
        %v868 = vpop.f32.mrb[0].mxu0
        %869 = vmatprep.mubr.f32.mxu0 0.0
        %v870 = vand.u32 %v320, 4294901760
        %v871 = vsub.f32 %v320, %v870
        %872 = vmatmul.mubr.f32.gmra.mrb[0].mxu0 %v871
        %v873 = vpop.f32.mrb[0].mxu0
        %v874 = vadd.f32 %v699, %v873
        %v875 = vpop.f32.mrb[0].mxu0
        %876 = vmatprep.mubr.f32.mxu0 0.0
        %v877 = vand.u32 %v323, 4294901760
        %v878 = vsub.f32 %v323, %v877
        %879 = vmatmul.mubr.f32.gmra.mrb[0].mxu0 %v878
        %v880 = vpop.f32.mrb[0].mxu0
        %v881 = vadd.f32 %v705, %v880
        %v882 = vpop.f32.mrb[0].mxu0
        %883 = vmatprep.mubr.f32.mxu0 0.0
        %v884 = vand.u32 %v326, 4294901760
        %v885 = vsub.f32 %v326, %v884
        %886 = vmatmul.mubr.f32.gmra.mrb[0].mxu0 %v885
        %v887 = vpop.f32.mrb[0].mxu0
        %v888 = vadd.f32 %v711, %v887
        %v889 = vpop.f32.mrb[0].mxu0
        %890 = vmatprep.mubr.f32.mxu0 0.0
        %v891 = vand.u32 %v329, 4294901760
        %v892 = vsub.f32 %v329, %v891
        %893 = vmatmul.mubr.f32.gmra.mrb[0].mxu0 %v892
        %v894 = vpop.f32.mrb[0].mxu0
        %v895 = vadd.f32 %v717, %v894
        %v896 = vpop.f32.mrb[0].mxu0
        %897 = vmatprep.mubr.f32.mxu0 0.0
        %v898 = vand.u32 %v332, 4294901760
        %v899 = vsub.f32 %v332, %v898
        %900 = vmatmul.mubr.f32.gmra.mrb[0].mxu0 %v899
        %v901 = vpop.f32.mrb[0].mxu0
        %v902 = vadd.f32 %v723, %v901
        %v903 = vpop.f32.mrb[0].mxu0
        %904 = vdwg.mxu0
        %905 = vmatprep.subr.mxu0 0.0
        %v906 = vand.u32 %v227, 4294901760
        %907 = vmatpush1.msra.mxu0 %v906
        %908 = vmatprep.subr.mxu0 0.0
        %909 = vmatpush1.msra.mxu0 0.0
        %910 = vmatprep.subr.mxu0 0.0
        %911 = vmatpush1.msra.mxu0 0.0
        %912 = vmatprep.subr.mxu0 0.0
        %913 = vmatpush1.msra.mxu0 0.0
        %914 = vmatprep.subr.mxu0 0.0
        %915 = vmatpush1.msra.mxu0 0.0
        %916 = vmatprep.subr.mxu0 0.0
        %917 = vmatpush1.msra.mxu0 0.0
        %918 = vmatprep.subr.mxu0 0.0
        %919 = vmatpush1.msra.mxu0 0.0
        %920 = vmatprep.subr.mxu0 0.0
        %921 = vmatpush1.msra.mxu0 0.0
        %922 = vmatprep.subr.mxu0 0.0
        %923 = vmatpush1.msra.mxu0 0.0
        %924 = vmatprep.subr.mxu0 0.0
        %925 = vmatpush1.msra.mxu0 0.0
        %926 = vmatprep.subr.mxu0 0.0
        %927 = vmatpush1.msra.mxu0 0.0
        %928 = vmatprep.subr.mxu0 0.0
        %929 = vmatpush1.msra.mxu0 0.0
        %930 = vmatprep.subr.mxu0 0.0
        %931 = vmatpush1.msra.mxu0 0.0
        %932 = vmatprep.subr.mxu0 0.0
        %933 = vmatpush1.msra.mxu0 0.0
        %934 = vmatprep.subr.mxu0 0.0
        %935 = vmatpush1.msra.mxu0 0.0
        %936 = vmatprep.subr.mxu0 0.0
        %937 = vmatpush1.msra.mxu0 0.0
        %938 = vmatprep.subr.mxu0 0.0
        %939 = vmatpush1.msra.mxu0 0.0
        %940 = vmatprep.subr.mxu0 0.0
        %941 = vmatpush1.msra.mxu0 0.0
        %942 = vmatprep.subr.mxu0 0.0
        %943 = vmatpush1.msra.mxu0 0.0
        %944 = vmatprep.subr.mxu0 0.0
        %945 = vmatpush1.msra.mxu0 0.0
        %946 = vmatprep.subr.mxu0 0.0
        %947 = vmatpush1.msra.mxu0 0.0
        %948 = vmatprep.subr.mxu0 0.0
        %949 = vmatpush1.msra.mxu0 0.0
        %950 = vmatprep.subr.mxu0 0.0
        %951 = vmatpush1.msra.mxu0 0.0
        %952 = vmatprep.subr.mxu0 0.0
        %953 = vmatpush1.msra.mxu0 0.0
        %954 = vmatprep.subr.mxu0 0.0
        %955 = vmatpush1.msra.mxu0 0.0
        %956 = vmatprep.subr.mxu0 0.0
        %957 = vmatpush1.msra.mxu0 0.0
        %958 = vmatprep.subr.mxu0 0.0
        %959 = vmatpush1.msra.mxu0 0.0
        %960 = vmatprep.subr.mxu0 0.0
        %961 = vmatpush1.msra.mxu0 0.0
        %962 = vmatprep.subr.mxu0 0.0
        %963 = vmatpush1.msra.mxu0 0.0
        %964 = vmatprep.subr.mxu0 0.0
        %965 = vmatpush1.msra.mxu0 0.0
        %966 = vmatprep.subr.mxu0 0.0
        %967 = vmatpush1.msra.mxu0 0.0
        %968 = vmatprep.subr.mxu0 0.0
        %969 = vmatpush1.msra.mxu0 0.0
        %970 = vmatprep.mubr.f32.mxu0 0.0
        %v971 = vand.u32 %v287, 4294901760
        %v972 = vsub.f32 %v287, %v971
        %v973 = vand.u32 %v972, 4294901760
        %974 = vmatmul.mubr.f32.gmra.mrb[0].mxu0 %v973
        %v975 = vpop.f32.mrb[0].mxu0
        %v976 = vadd.f32 %v797, %v975
        %v977 = vpop.f32.mrb[0].mxu0
        %978 = vmatprep.mubr.f32.mxu0 0.0
        %v979 = vand.u32 %v290, 4294901760
        %v980 = vsub.f32 %v290, %v979
        %v981 = vand.u32 %v980, 4294901760
        %982 = vmatmul.mubr.f32.gmra.mrb[0].mxu0 %v981
        %v983 = vpop.f32.mrb[0].mxu0
        %v984 = vadd.f32 %v804, %v983
        %v985 = vpop.f32.mrb[0].mxu0
        %986 = vmatprep.mubr.f32.mxu0 0.0
        %v987 = vand.u32 %v293, 4294901760
        %v988 = vsub.f32 %v293, %v987
        %v989 = vand.u32 %v988, 4294901760
        %990 = vmatmul.mubr.f32.gmra.mrb[0].mxu0 %v989
        %v991 = vpop.f32.mrb[0].mxu0
        %v992 = vadd.f32 %v811, %v991
        %v993 = vpop.f32.mrb[0].mxu0
        %994 = vmatprep.mubr.f32.mxu0 0.0
        %v995 = vand.u32 %v296, 4294901760
        %v996 = vsub.f32 %v296, %v995
        %v997 = vand.u32 %v996, 4294901760
        %998 = vmatmul.mubr.f32.gmra.mrb[0].mxu0 %v997
        %v999 = vpop.f32.mrb[0].mxu0
        %v1000 = vadd.f32 %v818, %v999
        %v1001 = vpop.f32.mrb[0].mxu0
        %1002 = vmatprep.mubr.f32.mxu0 0.0
        %v1003 = vand.u32 %v299, 4294901760
        %v1004 = vsub.f32 %v299, %v1003
        %v1005 = vand.u32 %v1004, 4294901760
        %1006 = vmatmul.mubr.f32.gmra.mrb[0].mxu0 %v1005
        %v1007 = vpop.f32.mrb[0].mxu0
        %v1008 = vadd.f32 %v825, %v1007
        %v1009 = vpop.f32.mrb[0].mxu0
        %1010 = vmatprep.mubr.f32.mxu0 0.0
        %v1011 = vand.u32 %v302, 4294901760
        %v1012 = vsub.f32 %v302, %v1011
        %v1013 = vand.u32 %v1012, 4294901760
        %1014 = vmatmul.mubr.f32.gmra.mrb[0].mxu0 %v1013
        %v1015 = vpop.f32.mrb[0].mxu0
        %v1016 = vadd.f32 %v832, %v1015
        %v1017 = vpop.f32.mrb[0].mxu0
        %1018 = vmatprep.mubr.f32.mxu0 0.0
        %v1019 = vand.u32 %v305, 4294901760
        %v1020 = vsub.f32 %v305, %v1019
        %v1021 = vand.u32 %v1020, 4294901760
        %1022 = vmatmul.mubr.f32.gmra.mrb[0].mxu0 %v1021
        %v1023 = vpop.f32.mrb[0].mxu0
        %v1024 = vadd.f32 %v839, %v1023
        %v1025 = vpop.f32.mrb[0].mxu0
        %1026 = vmatprep.mubr.f32.mxu0 0.0
        %v1027 = vand.u32 %v308, 4294901760
        %v1028 = vsub.f32 %v308, %v1027
        %v1029 = vand.u32 %v1028, 4294901760
        %1030 = vmatmul.mubr.f32.gmra.mrb[0].mxu0 %v1029
        %v1031 = vpop.f32.mrb[0].mxu0
        %v1032 = vadd.f32 %v846, %v1031
        %v1033 = vpop.f32.mrb[0].mxu0
        %1034 = vmatprep.mubr.f32.mxu0 0.0
        %v1035 = vand.u32 %v311, 4294901760
        %v1036 = vsub.f32 %v311, %v1035
        %v1037 = vand.u32 %v1036, 4294901760
        %1038 = vmatmul.mubr.f32.gmra.mrb[0].mxu0 %v1037
        %v1039 = vpop.f32.mrb[0].mxu0
        %v1040 = vadd.f32 %v853, %v1039
        %v1041 = vpop.f32.mrb[0].mxu0
        %1042 = vmatprep.mubr.f32.mxu0 0.0
        %v1043 = vand.u32 %v314, 4294901760
        %v1044 = vsub.f32 %v314, %v1043
        %v1045 = vand.u32 %v1044, 4294901760
        %1046 = vmatmul.mubr.f32.gmra.mrb[0].mxu0 %v1045
        %v1047 = vpop.f32.mrb[0].mxu0
        %v1048 = vadd.f32 %v860, %v1047
        %v1049 = vpop.f32.mrb[0].mxu0
        %1050 = vmatprep.mubr.f32.mxu0 0.0
        %v1051 = vand.u32 %v317, 4294901760
        %v1052 = vsub.f32 %v317, %v1051
        %v1053 = vand.u32 %v1052, 4294901760
        %1054 = vmatmul.mubr.f32.gmra.mrb[0].mxu0 %v1053
        %v1055 = vpop.f32.mrb[0].mxu0
        %v1056 = vadd.f32 %v867, %v1055
        %v1057 = vpop.f32.mrb[0].mxu0
        %1058 = vmatprep.mubr.f32.mxu0 0.0
        %v1059 = vand.u32 %v320, 4294901760
        %v1060 = vsub.f32 %v320, %v1059
        %v1061 = vand.u32 %v1060, 4294901760
        %1062 = vmatmul.mubr.f32.gmra.mrb[0].mxu0 %v1061
        %v1063 = vpop.f32.mrb[0].mxu0
        %v1064 = vadd.f32 %v874, %v1063
        %v1065 = vpop.f32.mrb[0].mxu0
        %1066 = vmatprep.mubr.f32.mxu0 0.0
        %v1067 = vand.u32 %v323, 4294901760
        %v1068 = vsub.f32 %v323, %v1067
        %v1069 = vand.u32 %v1068, 4294901760
        %1070 = vmatmul.mubr.f32.gmra.mrb[0].mxu0 %v1069
        %v1071 = vpop.f32.mrb[0].mxu0
        %v1072 = vadd.f32 %v881, %v1071
        %v1073 = vpop.f32.mrb[0].mxu0
        %1074 = vmatprep.mubr.f32.mxu0 0.0
        %v1075 = vand.u32 %v326, 4294901760
        %v1076 = vsub.f32 %v326, %v1075
        %v1077 = vand.u32 %v1076, 4294901760
        %1078 = vmatmul.mubr.f32.gmra.mrb[0].mxu0 %v1077
        %v1079 = vpop.f32.mrb[0].mxu0
        %v1080 = vadd.f32 %v888, %v1079
        %v1081 = vpop.f32.mrb[0].mxu0
        %1082 = vmatprep.mubr.f32.mxu0 0.0
        %v1083 = vand.u32 %v329, 4294901760
        %v1084 = vsub.f32 %v329, %v1083
        %v1085 = vand.u32 %v1084, 4294901760
        %1086 = vmatmul.mubr.f32.gmra.mrb[0].mxu0 %v1085
        %v1087 = vpop.f32.mrb[0].mxu0
        %v1088 = vadd.f32 %v895, %v1087
        %v1089 = vpop.f32.mrb[0].mxu0
        %1090 = vmatprep.mubr.f32.mxu0 0.0
        %v1091 = vand.u32 %v332, 4294901760
        %v1092 = vsub.f32 %v332, %v1091
        %v1093 = vand.u32 %v1092, 4294901760
        %1094 = vmatmul.mubr.f32.gmra.mrb[0].mxu0 %v1093
        %v1095 = vpop.f32.mrb[0].mxu0
        %v1096 = vadd.f32 %v902, %v1095
        %v1097 = vpop.f32.mrb[0].mxu0
        %1098 = vdwg.mxu0
        %1099 = vmatprep.subr.mxu0 0.0
        %v1100 = vand.u32 %v227, 4294901760
        %v1101 = vsub.f32 %v227, %v1100
        %v1102 = vand.u32 %v1101, 4294901760
        %1103 = vmatpush1.msra.mxu0 %v1102
        %1104 = vmatprep.subr.mxu0 0.0
        %1105 = vmatpush1.msra.mxu0 0.0
        %1106 = vmatprep.subr.mxu0 0.0
        %1107 = vmatpush1.msra.mxu0 0.0
        %1108 = vmatprep.subr.mxu0 0.0
        %1109 = vmatpush1.msra.mxu0 0.0
        %1110 = vmatprep.subr.mxu0 0.0
        %1111 = vmatpush1.msra.mxu0 0.0
        %1112 = vmatprep.subr.mxu0 0.0
        %1113 = vmatpush1.msra.mxu0 0.0
        %1114 = vmatprep.subr.mxu0 0.0
        %1115 = vmatpush1.msra.mxu0 0.0
        %1116 = vmatprep.subr.mxu0 0.0
        %1117 = vmatpush1.msra.mxu0 0.0
        %1118 = vmatprep.subr.mxu0 0.0
        %1119 = vmatpush1.msra.mxu0 0.0
        %1120 = vmatprep.subr.mxu0 0.0
        %1121 = vmatpush1.msra.mxu0 0.0
        %1122 = vmatprep.subr.mxu0 0.0
        %1123 = vmatpush1.msra.mxu0 0.0
        %1124 = vmatprep.subr.mxu0 0.0
        %1125 = vmatpush1.msra.mxu0 0.0
        %1126 = vmatprep.subr.mxu0 0.0
        %1127 = vmatpush1.msra.mxu0 0.0
        %1128 = vmatprep.subr.mxu0 0.0
        %1129 = vmatpush1.msra.mxu0 0.0
        %1130 = vmatprep.subr.mxu0 0.0
        %1131 = vmatpush1.msra.mxu0 0.0
        %1132 = vmatprep.subr.mxu0 0.0
        %1133 = vmatpush1.msra.mxu0 0.0
        %1134 = vmatprep.subr.mxu0 0.0
        %1135 = vmatpush1.msra.mxu0 0.0
        %1136 = vmatprep.subr.mxu0 0.0
        %1137 = vmatpush1.msra.mxu0 0.0
        %1138 = vmatprep.subr.mxu0 0.0
        %1139 = vmatpush1.msra.mxu0 0.0
        %1140 = vmatprep.subr.mxu0 0.0
        %1141 = vmatpush1.msra.mxu0 0.0
        %1142 = vmatprep.subr.mxu0 0.0
        %1143 = vmatpush1.msra.mxu0 0.0
        %1144 = vmatprep.subr.mxu0 0.0
        %1145 = vmatpush1.msra.mxu0 0.0
        %1146 = vmatprep.subr.mxu0 0.0
        %1147 = vmatpush1.msra.mxu0 0.0
        %1148 = vmatprep.subr.mxu0 0.0
        %1149 = vmatpush1.msra.mxu0 0.0
        %1150 = vmatprep.subr.mxu0 0.0
        %1151 = vmatpush1.msra.mxu0 0.0
        %1152 = vmatprep.subr.mxu0 0.0
        %1153 = vmatpush1.msra.mxu0 0.0
        %1154 = vmatprep.subr.mxu0 0.0
        %1155 = vmatpush1.msra.mxu0 0.0
        %1156 = vmatprep.subr.mxu0 0.0
        %1157 = vmatpush1.msra.mxu0 0.0
        %1158 = vmatprep.subr.mxu0 0.0
        %1159 = vmatpush1.msra.mxu0 0.0
        %1160 = vmatprep.subr.mxu0 0.0
        %1161 = vmatpush1.msra.mxu0 0.0
        %1162 = vmatprep.subr.mxu0 0.0
        %1163 = vmatpush1.msra.mxu0 0.0
        %1164 = vmatprep.subr.mxu0 0.0
        %1165 = vmatpush1.msra.mxu0 0.0
        %1166 = vmatprep.mubr.f32.mxu0 0.0
        %v1167 = vand.u32 %v287, 4294901760
        %1168 = vmatmul.mubr.f32.gmra.mrb[0].mxu0 %v1167
        %v1169 = vpop.f32.mrb[0].mxu0
        %v1170 = vadd.f32 %v976, %v1169
        %v1171 = vpop.f32.mrb[0].mxu0
        %1172 = vmatprep.mubr.f32.mxu0 0.0
        %v1173 = vand.u32 %v290, 4294901760
        %1174 = vmatmul.mubr.f32.gmra.mrb[0].mxu0 %v1173
        %v1175 = vpop.f32.mrb[0].mxu0
        %v1176 = vadd.f32 %v984, %v1175
        %v1177 = vpop.f32.mrb[0].mxu0
        %1178 = vmatprep.mubr.f32.mxu0 0.0
        %v1179 = vand.u32 %v293, 4294901760
        %1180 = vmatmul.mubr.f32.gmra.mrb[0].mxu0 %v1179
        %v1181 = vpop.f32.mrb[0].mxu0
        %v1182 = vadd.f32 %v992, %v1181
        %v1183 = vpop.f32.mrb[0].mxu0
        %1184 = vmatprep.mubr.f32.mxu0 0.0
        %v1185 = vand.u32 %v296, 4294901760
        %1186 = vmatmul.mubr.f32.gmra.mrb[0].mxu0 %v1185
        %v1187 = vpop.f32.mrb[0].mxu0
        %v1188 = vadd.f32 %v1000, %v1187
        %v1189 = vpop.f32.mrb[0].mxu0
        %1190 = vmatprep.mubr.f32.mxu0 0.0
        %v1191 = vand.u32 %v299, 4294901760
        %1192 = vmatmul.mubr.f32.gmra.mrb[0].mxu0 %v1191
        %v1193 = vpop.f32.mrb[0].mxu0
        %v1194 = vadd.f32 %v1008, %v1193
        %v1195 = vpop.f32.mrb[0].mxu0
        %1196 = vmatprep.mubr.f32.mxu0 0.0
        %v1197 = vand.u32 %v302, 4294901760
        %1198 = vmatmul.mubr.f32.gmra.mrb[0].mxu0 %v1197
        %v1199 = vpop.f32.mrb[0].mxu0
        %v1200 = vadd.f32 %v1016, %v1199
        %v1201 = vpop.f32.mrb[0].mxu0
        %1202 = vmatprep.mubr.f32.mxu0 0.0
        %v1203 = vand.u32 %v305, 4294901760
        %1204 = vmatmul.mubr.f32.gmra.mrb[0].mxu0 %v1203
        %v1205 = vpop.f32.mrb[0].mxu0
        %v1206 = vadd.f32 %v1024, %v1205
        %v1207 = vpop.f32.mrb[0].mxu0
        %1208 = vmatprep.mubr.f32.mxu0 0.0
        %v1209 = vand.u32 %v308, 4294901760
        %1210 = vmatmul.mubr.f32.gmra.mrb[0].mxu0 %v1209
        %v1211 = vpop.f32.mrb[0].mxu0
        %v1212 = vadd.f32 %v1032, %v1211
        %v1213 = vpop.f32.mrb[0].mxu0
        %1214 = vmatprep.mubr.f32.mxu0 0.0
        %v1215 = vand.u32 %v311, 4294901760
        %1216 = vmatmul.mubr.f32.gmra.mrb[0].mxu0 %v1215
        %v1217 = vpop.f32.mrb[0].mxu0
        %v1218 = vadd.f32 %v1040, %v1217
        %v1219 = vpop.f32.mrb[0].mxu0
        %1220 = vmatprep.mubr.f32.mxu0 0.0
        %v1221 = vand.u32 %v314, 4294901760
        %1222 = vmatmul.mubr.f32.gmra.mrb[0].mxu0 %v1221
        %v1223 = vpop.f32.mrb[0].mxu0
        %v1224 = vadd.f32 %v1048, %v1223
        %v1225 = vpop.f32.mrb[0].mxu0
        %1226 = vmatprep.mubr.f32.mxu0 0.0
        %v1227 = vand.u32 %v317, 4294901760
        %1228 = vmatmul.mubr.f32.gmra.mrb[0].mxu0 %v1227
        %v1229 = vpop.f32.mrb[0].mxu0
        %v1230 = vadd.f32 %v1056, %v1229
        %v1231 = vpop.f32.mrb[0].mxu0
        %1232 = vmatprep.mubr.f32.mxu0 0.0
        %v1233 = vand.u32 %v320, 4294901760
        %1234 = vmatmul.mubr.f32.gmra.mrb[0].mxu0 %v1233
        %v1235 = vpop.f32.mrb[0].mxu0
        %v1236 = vadd.f32 %v1064, %v1235
        %v1237 = vpop.f32.mrb[0].mxu0
        %1238 = vmatprep.mubr.f32.mxu0 0.0
        %v1239 = vand.u32 %v323, 4294901760
        %1240 = vmatmul.mubr.f32.gmra.mrb[0].mxu0 %v1239
        %v1241 = vpop.f32.mrb[0].mxu0
        %v1242 = vadd.f32 %v1072, %v1241
        %v1243 = vpop.f32.mrb[0].mxu0
        %1244 = vmatprep.mubr.f32.mxu0 0.0
        %v1245 = vand.u32 %v326, 4294901760
        %1246 = vmatmul.mubr.f32.gmra.mrb[0].mxu0 %v1245
        %v1247 = vpop.f32.mrb[0].mxu0
        %v1248 = vadd.f32 %v1080, %v1247
        %v1249 = vpop.f32.mrb[0].mxu0
        %1250 = vmatprep.mubr.f32.mxu0 0.0
        %v1251 = vand.u32 %v329, 4294901760
        %1252 = vmatmul.mubr.f32.gmra.mrb[0].mxu0 %v1251
        %v1253 = vpop.f32.mrb[0].mxu0
        %v1254 = vadd.f32 %v1088, %v1253
        %v1255 = vpop.f32.mrb[0].mxu0
        %1256 = vmatprep.mubr.f32.mxu0 0.0
        %v1257 = vand.u32 %v332, 4294901760
        %1258 = vmatmul.mubr.f32.gmra.mrb[0].mxu0 %v1257
        %v1259 = vpop.f32.mrb[0].mxu0
        %v1260 = vadd.f32 %v1096, %v1259
        %v1261 = vpop.f32.mrb[0].mxu0
        %1262 = vdwg.mxu0
        %1263 = vmatprep.subr.mxu0 0.0
        %v1264 = vand.u32 %v227, 4294901760
        %1265 = vmatpush1.msra.mxu0 %v1264
        %1266 = vmatprep.subr.mxu0 0.0
        %1267 = vmatpush1.msra.mxu0 0.0
        %1268 = vmatprep.subr.mxu0 0.0
        %1269 = vmatpush1.msra.mxu0 0.0
        %1270 = vmatprep.subr.mxu0 0.0
        %1271 = vmatpush1.msra.mxu0 0.0
        %1272 = vmatprep.subr.mxu0 0.0
        %1273 = vmatpush1.msra.mxu0 0.0
        %1274 = vmatprep.subr.mxu0 0.0
        %1275 = vmatpush1.msra.mxu0 0.0
        %1276 = vmatprep.subr.mxu0 0.0
        %1277 = vmatpush1.msra.mxu0 0.0
        %1278 = vmatprep.subr.mxu0 0.0
        %1279 = vmatpush1.msra.mxu0 0.0
        %1280 = vmatprep.subr.mxu0 0.0
        %1281 = vmatpush1.msra.mxu0 0.0
        %1282 = vmatprep.subr.mxu0 0.0
        %1283 = vmatpush1.msra.mxu0 0.0
        %1284 = vmatprep.subr.mxu0 0.0
        %1285 = vmatpush1.msra.mxu0 0.0
        %1286 = vmatprep.subr.mxu0 0.0
        %1287 = vmatpush1.msra.mxu0 0.0
        %1288 = vmatprep.subr.mxu0 0.0
        %1289 = vmatpush1.msra.mxu0 0.0
        %1290 = vmatprep.subr.mxu0 0.0
        %1291 = vmatpush1.msra.mxu0 0.0
        %1292 = vmatprep.subr.mxu0 0.0
        %1293 = vmatpush1.msra.mxu0 0.0
        %1294 = vmatprep.subr.mxu0 0.0
        %1295 = vmatpush1.msra.mxu0 0.0
        %1296 = vmatprep.subr.mxu0 0.0
        %1297 = vmatpush1.msra.mxu0 0.0
        %1298 = vmatprep.subr.mxu0 0.0
        %1299 = vmatpush1.msra.mxu0 0.0
        %1300 = vmatprep.subr.mxu0 0.0
        %1301 = vmatpush1.msra.mxu0 0.0
        %1302 = vmatprep.subr.mxu0 0.0
        %1303 = vmatpush1.msra.mxu0 0.0
        %1304 = vmatprep.subr.mxu0 0.0
        %1305 = vmatpush1.msra.mxu0 0.0
        %1306 = vmatprep.subr.mxu0 0.0
        %1307 = vmatpush1.msra.mxu0 0.0
        %1308 = vmatprep.subr.mxu0 0.0
        %1309 = vmatpush1.msra.mxu0 0.0
        %1310 = vmatprep.subr.mxu0 0.0
        %1311 = vmatpush1.msra.mxu0 0.0
        %1312 = vmatprep.subr.mxu0 0.0
        %1313 = vmatpush1.msra.mxu0 0.0
        %1314 = vmatprep.subr.mxu0 0.0
        %1315 = vmatpush1.msra.mxu0 0.0
        %1316 = vmatprep.subr.mxu0 0.0
        %1317 = vmatpush1.msra.mxu0 0.0
        %1318 = vmatprep.subr.mxu0 0.0
        %1319 = vmatpush1.msra.mxu0 0.0
        %1320 = vmatprep.subr.mxu0 0.0
        %1321 = vmatpush1.msra.mxu0 0.0
        %1322 = vmatprep.subr.mxu0 0.0
        %1323 = vmatpush1.msra.mxu0 0.0
        %1324 = vmatprep.subr.mxu0 0.0
        %1325 = vmatpush1.msra.mxu0 0.0
        %1326 = vmatprep.subr.mxu0 0.0
        %1327 = vmatpush1.msra.mxu0 0.0
        %1328 = vmatprep.mubr.f32.mxu0 0.0
        %v1329 = vand.u32 %v287, 4294901760
        %1330 = vmatmul.mubr.f32.gmra.mrb[0].mxu0 %v1329
        %v1331 = vpop.f32.mrb[0].mxu0
        %v1332 = vadd.f32 %v1170, %v1331
        %v1333 = vpop.f32.mrb[0].mxu0
        %1334 = vmatprep.mubr.f32.mxu0 0.0
        %v1335 = vand.u32 %v290, 4294901760
        %1336 = vmatmul.mubr.f32.gmra.mrb[0].mxu0 %v1335
        %v1337 = vpop.f32.mrb[0].mxu0
        %v1338 = vadd.f32 %v1176, %v1337
        %v1339 = vpop.f32.mrb[0].mxu0
        %1340 = vmatprep.mubr.f32.mxu0 0.0
        %v1341 = vand.u32 %v293, 4294901760
        %1342 = vmatmul.mubr.f32.gmra.mrb[0].mxu0 %v1341
        %v1343 = vpop.f32.mrb[0].mxu0
        %v1344 = vadd.f32 %v1182, %v1343
        %v1345 = vpop.f32.mrb[0].mxu0
        %1346 = vmatprep.mubr.f32.mxu0 0.0
        %v1347 = vand.u32 %v296, 4294901760
        %1348 = vmatmul.mubr.f32.gmra.mrb[0].mxu0 %v1347
        %v1349 = vpop.f32.mrb[0].mxu0
        %v1350 = vadd.f32 %v1188, %v1349
        %v1351 = vpop.f32.mrb[0].mxu0
        %1352 = vmatprep.mubr.f32.mxu0 0.0
        %v1353 = vand.u32 %v299, 4294901760
        %1354 = vmatmul.mubr.f32.gmra.mrb[0].mxu0 %v1353
        %v1355 = vpop.f32.mrb[0].mxu0
        %v1356 = vadd.f32 %v1194, %v1355
        %v1357 = vpop.f32.mrb[0].mxu0
        %1358 = vmatprep.mubr.f32.mxu0 0.0
        %v1359 = vand.u32 %v302, 4294901760
        %1360 = vmatmul.mubr.f32.gmra.mrb[0].mxu0 %v1359
        %v1361 = vpop.f32.mrb[0].mxu0
        %v1362 = vadd.f32 %v1200, %v1361
        %v1363 = vpop.f32.mrb[0].mxu0
        %1364 = vmatprep.mubr.f32.mxu0 0.0
        %v1365 = vand.u32 %v305, 4294901760
        %1366 = vmatmul.mubr.f32.gmra.mrb[0].mxu0 %v1365
        %v1367 = vpop.f32.mrb[0].mxu0
        %v1368 = vadd.f32 %v1206, %v1367
        %v1369 = vpop.f32.mrb[0].mxu0
        %1370 = vmatprep.mubr.f32.mxu0 0.0
        %v1371 = vand.u32 %v308, 4294901760
        %1372 = vmatmul.mubr.f32.gmra.mrb[0].mxu0 %v1371
        %v1373 = vpop.f32.mrb[0].mxu0
        %v1374 = vadd.f32 %v1212, %v1373
        %v1375 = vpop.f32.mrb[0].mxu0
        %1376 = vmatprep.mubr.f32.mxu0 0.0
        %v1377 = vand.u32 %v311, 4294901760
        %1378 = vmatmul.mubr.f32.gmra.mrb[0].mxu0 %v1377
        %v1379 = vpop.f32.mrb[0].mxu0
        %v1380 = vadd.f32 %v1218, %v1379
        %v1381 = vpop.f32.mrb[0].mxu0
        %1382 = vmatprep.mubr.f32.mxu0 0.0
        %v1383 = vand.u32 %v314, 4294901760
        %1384 = vmatmul.mubr.f32.gmra.mrb[0].mxu0 %v1383
        %v1385 = vpop.f32.mrb[0].mxu0
        %v1386 = vadd.f32 %v1224, %v1385
        %v1387 = vpop.f32.mrb[0].mxu0
        %1388 = vmatprep.mubr.f32.mxu0 0.0
        %v1389 = vand.u32 %v317, 4294901760
        %1390 = vmatmul.mubr.f32.gmra.mrb[0].mxu0 %v1389
        %v1391 = vpop.f32.mrb[0].mxu0
        %v1392 = vadd.f32 %v1230, %v1391
        %v1393 = vpop.f32.mrb[0].mxu0
        %1394 = vmatprep.mubr.f32.mxu0 0.0
        %v1395 = vand.u32 %v320, 4294901760
        %1396 = vmatmul.mubr.f32.gmra.mrb[0].mxu0 %v1395
        %v1397 = vpop.f32.mrb[0].mxu0
        %v1398 = vadd.f32 %v1236, %v1397
        %v1399 = vpop.f32.mrb[0].mxu0
        %1400 = vmatprep.mubr.f32.mxu0 0.0
        %v1401 = vand.u32 %v323, 4294901760
        %1402 = vmatmul.mubr.f32.gmra.mrb[0].mxu0 %v1401
        %v1403 = vpop.f32.mrb[0].mxu0
        %v1404 = vadd.f32 %v1242, %v1403
        %v1405 = vpop.f32.mrb[0].mxu0
        %1406 = vmatprep.mubr.f32.mxu0 0.0
        %v1407 = vand.u32 %v326, 4294901760
        %1408 = vmatmul.mubr.f32.gmra.mrb[0].mxu0 %v1407
        %v1409 = vpop.f32.mrb[0].mxu0
        %v1410 = vadd.f32 %v1248, %v1409
        %v1411 = vpop.f32.mrb[0].mxu0
        %1412 = vmatprep.mubr.f32.mxu0 0.0
        %v1413 = vand.u32 %v329, 4294901760
        %1414 = vmatmul.mubr.f32.gmra.mrb[0].mxu0 %v1413
        %v1415 = vpop.f32.mrb[0].mxu0
        %v1416 = vadd.f32 %v1254, %v1415
        %v1417 = vpop.f32.mrb[0].mxu0
        %1418 = vmatprep.mubr.f32.mxu0 0.0
        %v1419 = vand.u32 %v332, 4294901760
        %1420 = vmatmul.mubr.f32.gmra.mrb[0].mxu0 %v1419
        %v1421 = vpop.f32.mrb[0].mxu0
        %v1422 = vadd.f32 %v1260, %v1421
        %v1423 = vpop.f32.mrb[0].mxu0
        %1424 = vdwg.mxu0
        %v1425 = vadd.f32 %v237, %v1332
        %v1426 = vadd.f32 %v238, %v1338
        %v1427 = vadd.f32 %v239, %v1344
        %v1428 = vadd.f32 %v240, %v1350
        %v1429 = vadd.f32 %v241, %v1356
        %v1430 = vadd.f32 %v242, %v1362
        %v1431 = vadd.f32 %v243, %v1368
        %v1432 = vadd.f32 %v244, %v1374
        %v1433 = vadd.f32 %v245, %v1380
        %v1434 = vadd.f32 %v246, %v1386
        %v1435 = vadd.f32 %v247, %v1392
        %v1436 = vadd.f32 %v248, %v1398
        %v1437 = vadd.f32 %v249, %v1404
        %v1438 = vadd.f32 %v250, %v1410
        %v1439 = vadd.f32 %v251, %v1416
        %v1440 = vadd.f32 %v252, %v1422
        %1441 = vst [vmem:[%s192] sm:$0xff] %v1425
        %1442 = vst [vmem:[%s192 + $0x8] sm:$0xff] %v1426
        %1443 = vst [vmem:[%s192 + $0x10] sm:$0xff] %v1427
        %1444 = vst [vmem:[%s192 + $0x18] sm:$0xff] %v1428
        %1445 = vst [vmem:[%s192 + $0x20] sm:$0xff] %v1429
        %1446 = vst [vmem:[%s192 + $0x28] sm:$0xff] %v1430
        %1447 = vst [vmem:[%s192 + $0x30] sm:$0xff] %v1431
        %1448 = vst [vmem:[%s192 + $0x38] sm:$0xff] %v1432
        %1449 = vst [vmem:[%s192 + $0x40] sm:$0xff] %v1433
        %1450 = vst [vmem:[%s192 + $0x48] sm:$0xff] %v1434
        %1451 = vst [vmem:[%s192 + $0x50] sm:$0xff] %v1435
        %1452 = vst [vmem:[%s192 + $0x58] sm:$0xff] %v1436
        %1453 = vst [vmem:[%s192 + $0x60] sm:$0xff] %v1437
        %1454 = vst [vmem:[%s192 + $0x68] sm:$0xff] %v1438
        %1455 = vst [vmem:[%s192 + $0x70] sm:$0xff] %v1439
        %1456 = vst [vmem:[%s192 + $0x78] sm:$0xff] %v1440
        %s1457 = sand.u32 %s77, 1
        %s1458 = scalar_lea.sflag [#allocation4], %s1457
        %s1459 = sand.u32 %s77, 1
        %s1460 = scalar_lea.vmem [#allocation5], %s1459
        %s1461 = sand.u32 %s103, 1
        %s1462 = scalar_lea.sflag [#allocation7], %s1461
        %s1463 = sand.u32 %s103, 1
        %s1464 = smul.addr %s1463, 128
        %s1465 = scalar_lea.vmem [#allocation6], %s1464
        // Predicated region
        $region33: #{tpu_custom_call.1} parent=23 // pred_check
          %p1466 = pneg %p87
        $region34: #{tpu_custom_call.1} parent=23 // pred_check_branch
          %1468 = sbr.rel (%p1466) target = $region36
        $region35: #{tpu_custom_call.1} parent=23 // pred_region
          %s1470 = ssub.s32 16, 16
          %1471 = vsyncadd %s1458, %s1470
          %s1472 = smul.addr %s27, 16
          %s1473 = scalar_lea.hbm %s1, %s1472
          %s1475 = sshll.u32 %s1460, 4
          %s1476 = int_to_ptr.vmem [resolvable:$true] %s1475
          %1478 = dma.vmem_to_hbm [thread:$0]  %s1476, 16, %s1473, %s1458
        $region36: #{tpu_custom_call.1} parent=23 // pred_fallthru
          _
        // Predicated region
        $region37: #{tpu_custom_call.1} parent=23 // pred_check
          %p1479 = pneg %p113
        $region38: #{tpu_custom_call.1} parent=23 // pred_check_branch
          %1481 = sbr.rel (%p1479) target = $region40
        $region39: #{tpu_custom_call.1} parent=23 // pred_region
          %s1483 = ssub.s32 2048, 2048
          %1484 = vsyncadd %s1462, %s1483
          %s1485 = smul.addr %s27, 16
          %s1486 = smul.addr %s1485, 128
          %s1487 = scalar_lea.hbm %s2, %s1486
          %s1488 = sshll.u32 %s1465, 4
          %s1489 = int_to_ptr.vmem [resolvable:$true] %s1488
          %1494 = dma.vmem_to_hbm [thread:$0]  %s1489, 2048, %s1487, %s1462, 128, 128, 8
        $region40: #{tpu_custom_call.1} parent=23 // pred_fallthru
          _
      $region24: #{tpu_custom_call.1} parent=5 // pred_fallthru
        _
      %p1495 = scmp.le.s32.totalorder 2, %s18
      // Predicated region
      $region41: #{tpu_custom_call.1} parent=5 // pred_check
        %p1496 = pneg %p1495
      $region42: #{tpu_custom_call.1} parent=5 // pred_check_branch
        %1498 = sbr.rel (%p1496) target = $region44
      $region43: #{tpu_custom_call.1} parent=5 // pred_region
        %s1499 = ssub.s32 %s18, 2
        // Predicated region
        $region45: #{tpu_custom_call.1} parent=43 // pred_check
          %p1500 = pneg %p93
        $region46: #{tpu_custom_call.1} parent=43 // pred_check_branch
          %1502 = sbr.rel (%p1500) target = $region48
        $region47: #{tpu_custom_call.1} parent=43 // pred_region
          %s1503 = sand.u32 %s78, 1
          %s1504 = scalar_lea.sflag [#allocation4], %s1503
          %s1505 = sand.u32 %s78, 1
          %s1506 = scalar_lea.vmem [#allocation5], %s1505
          %1507 = dma.done %s1504, 16
        $region48: #{tpu_custom_call.1} parent=43 // pred_fallthru
          _
        // Predicated region
        $region49: #{tpu_custom_call.1} parent=43 // pred_check
          %p1508 = pneg %p119
        $region50: #{tpu_custom_call.1} parent=43 // pred_check_branch
          %1510 = sbr.rel (%p1508) target = $region52
        $region51: #{tpu_custom_call.1} parent=43 // pred_region
          %s1511 = sand.u32 %s104, 1
          %s1512 = scalar_lea.sflag [#allocation7], %s1511
          %s1513 = sand.u32 %s104, 1
          %s1514 = smul.addr %s1513, 128
          %s1515 = scalar_lea.vmem [#allocation6], %s1514
          %1516 = dma.done %s1512, 2048
        $region52: #{tpu_custom_call.1} parent=43 // pred_fallthru
          _
      $region44: #{tpu_custom_call.1} parent=5 // pred_fallthru
        _
    $region6: #{tpu_custom_call.1} parent=1 // loop_footer
      %s22 = sadd.s32 1, %s18
    $region7: #{tpu_custom_call.1} parent=1 // loop_footer_branch
      %17 = sbr.rel target = $region3
    $region8: #{tpu_custom_call.1} parent=1 // loop_exit
      _
    %1517 = vsyncpa [#allocation3], 1
    %s1518 = scalar_lea.sflag [#allocation3], 1
    %1519 = vsyncpa %s1518, 1
    %1520 = vsyncpa [#allocation4], 1
    %s1521 = scalar_lea.sflag [#allocation4], 1
    %1522 = vsyncpa %s1521, 1
    %1523 = vsyncpa [#allocation7], 1
    %s1524 = scalar_lea.sflag [#allocation7], 1
    %1525 = vsyncpa %s1524, 1

</llo_original>
